<compile_context>
chip_gen: v7x
topology: tpu7x:2x2x1
jax: 0.10.0
libtpu: 0.0.40
codegen_flags: <defaults>
</compile_context>

<pallas_src>
import functools

import jax
import jax.numpy as jnp
from jax.experimental import pallas as pl
from jax.experimental.pallas import tpu as pltpu

HIDDEN = 512
LANE = 128
MIN_ROW_TILE = 16   # bf16 native sublane tile (16, 128)


def _round_up(n, m):
    return (n + m - 1) // m * m


def _cdiv(a, b):
    return (a + b - 1) // b


def _default_bf16_epilogue():
    """bf16 VPU exists on v6e/v7x; v2-v5e lack it (keep f32 epilogue there)."""
    try:
        kind = jax.devices()[0].device_kind.lower()
    except Exception:
        return True
    if any(tag in kind for tag in ("v2", "v3", "v4", "v5")):
        return False
    return True


def _mlp_kernel(x_ref,
                w1_ref, b1_ref,
                w2_ref, b2_ref,
                w3_ref, b3_ref,
                w4_ref, b4_ref,
                o_ref,
                *, bf16_epilogue):
    """Fused 4-layer MLP: (Linear + ReLU) x 3, then Linear.

    bf16 operands on the MXU with f32 accumulation. Hidden-layer epilogue
    (bias + ReLU) runs in bf16 on v6e/v7x, f32 on older chips.
    """
    x = x_ref[...]                                            # bf16 (rows, in_pad)

    def hidden(h, w_ref, b_ref):
        acc = jnp.dot(h, w_ref[...], preferred_element_type=jnp.float32)
        if bf16_epilogue:
            a = acc.astype(jnp.bfloat16) + b_ref[...]         # bf16 VPU
            return jnp.maximum(a, 0.0)                        # stays bf16
        a = acc + b_ref[...].astype(jnp.float32)              # f32 VPU (v5e)
        return jnp.maximum(a, 0.0).astype(jnp.bfloat16)

    h = hidden(x, w1_ref, b1_ref)
    h = hidden(h, w2_ref, b2_ref)
    h = hidden(h, w3_ref, b3_ref)

    # Final layer: f32 bias-add on the f32 accumulator, lane-dense full store.
    out = jnp.dot(h, w4_ref[...], preferred_element_type=jnp.float32) + b4_ref[...]
    o_ref[...] = out.astype(o_ref.dtype)


def prepare_object_encoder_params(params):
    """One-time pad + bf16 cast of weights/biases (hoisted out of the forward)."""
    w1, b1, w2, b2, w3, b3, w4, b4 = params
    input_dim, output_dim = int(w1.shape[0]), int(w4.shape[1])
    in_pad = _round_up(input_dim, LANE)
    out_pad = _round_up(output_dim, LANE)

    w1p = jnp.zeros((in_pad, HIDDEN), jnp.bfloat16).at[:input_dim, :].set(
        w1.astype(jnp.bfloat16))
    w2b = w2.astype(jnp.bfloat16)
    w3b = w3.astype(jnp.bfloat16)
    w4p = jnp.zeros((HIDDEN, out_pad), jnp.bfloat16).at[:, :output_dim].set(
        w4.astype(jnp.bfloat16))

    b1b = b1.reshape(1, HIDDEN).astype(jnp.bfloat16)
    b2b = b2.reshape(1, HIDDEN).astype(jnp.bfloat16)
    b3b = b3.reshape(1, HIDDEN).astype(jnp.bfloat16)
    # Last-layer bias stays f32: added to the f32 accumulator before the store.
    b4p = jnp.zeros((1, out_pad), jnp.float32).at[:, :output_dim].set(
        b4.reshape(1, -1).astype(jnp.float32))

    prep = (w1p, b1b, w2b, b2b, w3b, b3b, w4p, b4p)
    return prep, output_dim


@functools.partial(jax.jit,
                   static_argnames=("output_dim", "block_rows", "bf16_epilogue"))
def _object_encoder_call(x, prep, *, output_dim, block_rows, bf16_epilogue):
    w1p, b1b, w2b, b2b, w3b, b3b, w4p, b4p = prep
    in_pad = w1p.shape[0]
    out_pad = w4p.shape[1]
    input_dim = x.shape[-1]

    lead_shape = x.shape[:-1]
    x2d = x.reshape(-1, input_dim)
    n_rows = x2d.shape[0]

    # Row tiling: clamp block_rows to a 256 multiple; pad rows only to the bf16
    # sublane unit (16); if more than one tile is needed, split into near-equal
    # grid steps so padding waste stays tiny and >=2 steps feed both v7x cores.
    block_rows = max(256, _round_up(int(block_rows), 256))
    rows_pad0 = max(MIN_ROW_TILE, _round_up(n_rows, MIN_ROW_TILE))
    if rows_pad0 <= block_rows:
        eff_block_rows = rows_pad0
    else:
        g = _cdiv(rows_pad0, block_rows)
        eff_block_rows = _round_up(_cdiv(rows_pad0, g), MIN_ROW_TILE)
    n_steps = _cdiv(rows_pad0, eff_block_rows)
    rows_pad = eff_block_rows * n_steps

    # Lane-dense, zero-padded bf16 input (zero K/rows padding keeps results exact).
    xp = jnp.zeros((rows_pad, in_pad), jnp.bfloat16)
    xp = xp.at[:n_rows, :input_dim].set(x2d.astype(jnp.bfloat16))

    grid = (n_steps,)
    x_spec = pl.BlockSpec((eff_block_rows, in_pad), lambda i: (i, 0))
    o_spec = pl.BlockSpec((eff_block_rows, out_pad), lambda i: (i, 0))

    def full_spec(shape):
        # Weights/biases fully VMEM-resident (constant block index -> no re-DMA).
        return pl.BlockSpec(shape, lambda i: (0, 0))

    flops = 2 * rows_pad * (in_pad * HIDDEN
                            + 2 * HIDDEN * HIDDEN
                            + HIDDEN * out_pad)
    bytes_accessed = (xp.size * 2
                      + (w1p.size + w2b.size + w3b.size + w4p.size) * 2
                      + (b1b.size + b2b.size + b3b.size) * 2 + b4p.size * 4
                      + rows_pad * out_pad * x.dtype.itemsize)

    kernel = functools.partial(_mlp_kernel, bf16_epilogue=bf16_epilogue)

    out = pl.pallas_call(
        kernel,
        out_shape=jax.ShapeDtypeStruct((rows_pad, out_pad), x.dtype),
        grid_spec=pltpu.PrefetchScalarGridSpec(
            num_scalar_prefetch=0,
            grid=grid,
            in_specs=[
                x_spec,
                full_spec(w1p.shape), full_spec(b1b.shape),
                full_spec(w2b.shape), full_spec(b2b.shape),
                full_spec(w3b.shape), full_spec(b3b.shape),
                full_spec(w4p.shape), full_spec(b4p.shape),
            ],
            out_specs=o_spec,
        ),
        compiler_params=pltpu.CompilerParams(
            dimension_semantics=("parallel",),
            vmem_limit_bytes=32 << 20,
        ),
        cost_estimate=pl.CostEstimate(
            flops=flops, transcendentals=0, bytes_accessed=bytes_accessed),
    )(xp, w1p, b1b, w2b, b2b, w3b, b3b, w4p, b4p)

    out = out[:n_rows, :output_dim]
    return out.reshape(*lead_shape, output_dim)


def object_encoder_forward(x, prep, output_dim, *, block_rows=1024,
                           bf16_epilogue=None):
    """Applies ObjectEncoder to x of shape (..., input_dim) using prepared params."""
    if bf16_epilogue is None:
        bf16_epilogue = _default_bf16_epilogue()
    return _object_encoder_call(x, prep, output_dim=int(output_dim),
                                block_rows=int(block_rows),
                                bf16_epilogue=bool(bf16_epilogue))


def init_object_encoder_params(key, input_dim, output_dim, dtype=jnp.float32):
    """Deterministic synthetic init matching the nn.Linear shapes of ObjectEncoder.

    Weights are stored as (in_features, out_features) so the kernel computes
    y = x @ W + b (equivalent to PyTorch's x @ W_pt.T + b).
    """
    dims = [(input_dim, HIDDEN), (HIDDEN, HIDDEN), (HIDDEN, HIDDEN), (HIDDEN, output_dim)]
    params = []
    for (fan_in, fan_out) in dims:
        key, wk, bk = jax.random.split(key, 3)
        bound = 1.0 / (fan_in ** 0.5)
        w = jax.random.uniform(wk, (fan_in, fan_out), dtype, minval=-bound, maxval=bound)
        b = jax.random.uniform(bk, (1, fan_out), dtype, minval=-bound, maxval=bound)
        params.extend([w, b])
    return tuple(params)


def _reference_forward(x, params):
    """Pure-JAX f32 reference of the PyTorch forward."""
    w1, b1, w2, b2, w3, b3, w4, b4 = params
    h = jnp.maximum(x @ w1 + b1, 0.0)
    h = jnp.maximum(h @ w2 + b2, 0.0)
    h = jnp.maximum(h @ w3 + b3, 0.0)
    return h @ w4 + b4


if __name__ == "__main__":
    key = jax.random.PRNGKey(0)
    kx, kp = jax.random.split(key)

    batch, seq = 2, 8          # 16 object slots total
    input_dim, output_dim = 32, 16

    # x: (batch, seq, input_dim) — object feature vectors
    x = jax.random.normal(kx, (batch, seq, input_dim), jnp.float32)
    params = init_object_encoder_params(kp, input_dim, output_dim)

    # One-time weight prep (padding + bf16 cast) hoisted out of the forward path.
    prep, out_dim = prepare_object_encoder_params(params)
    prep = jax.tree_util.tree_map(jax.block_until_ready, prep)

    y = object_encoder_forward(x, prep, out_dim)
    y = jax.block_until_ready(y)

    y_ref = _reference_forward(x.reshape(-1, input_dim), params).reshape(
        batch, seq, output_dim)
    assert y.shape == (batch, seq, output_dim)
    # bf16 MXU operands / bf16 epilogue with f32 accumulation -> ~1e-2 vs f32 ref.
    max_err = float(jnp.max(jnp.abs(y - y_ref)))
    assert jnp.allclose(y, y_ref, atol=5e-2, rtol=5e-2), max_err

    print("KERNEL_OK")
</pallas_src>

<mosaic_0001>
module attributes {stable_mosaic.version = 11 : i64} {
  func.func @_mlp_kernel(%arg0: i32, %arg1: memref<16x128xbf16, #tpu.memory_space<vmem>>, %arg2: memref<128x512xbf16, #tpu.memory_space<vmem>>, %arg3: memref<1x512xbf16, #tpu.memory_space<vmem>>, %arg4: memref<512x512xbf16, #tpu.memory_space<vmem>>, %arg5: memref<1x512xbf16, #tpu.memory_space<vmem>>, %arg6: memref<512x512xbf16, #tpu.memory_space<vmem>>, %arg7: memref<1x512xbf16, #tpu.memory_space<vmem>>, %arg8: memref<512x128xbf16, #tpu.memory_space<vmem>>, %arg9: memref<1x128xf32, #tpu.memory_space<vmem>>, %arg10: memref<16x128xf32, #tpu.memory_space<vmem>>) attributes {dimension_semantics = [#tpu.dimension_semantics<parallel>], iteration_bounds = array<i64: 1>, scalar_prefetch = 0 : i64, scratch_operands = 0 : i64, tpu.core_type = #tpu.core_type<tc>, window_params = [{transform_indices = @transform_0, window_bounds = array<i64: 16, 128>}, {pipeline_mode = #tpu.pipeline_mode<synchronous>, transform_indices = @transform_1, window_bounds = array<i64: 128, 512>}, {pipeline_mode = #tpu.pipeline_mode<synchronous>, transform_indices = @transform_2, window_bounds = array<i64: 1, 512>}, {pipeline_mode = #tpu.pipeline_mode<synchronous>, transform_indices = @transform_3, window_bounds = array<i64: 512, 512>}, {pipeline_mode = #tpu.pipeline_mode<synchronous>, transform_indices = @transform_4, window_bounds = array<i64: 1, 512>}, {pipeline_mode = #tpu.pipeline_mode<synchronous>, transform_indices = @transform_5, window_bounds = array<i64: 512, 512>}, {pipeline_mode = #tpu.pipeline_mode<synchronous>, transform_indices = @transform_6, window_bounds = array<i64: 1, 512>}, {pipeline_mode = #tpu.pipeline_mode<synchronous>, transform_indices = @transform_7, window_bounds = array<i64: 512, 128>}, {pipeline_mode = #tpu.pipeline_mode<synchronous>, transform_indices = @transform_8, window_bounds = array<i64: 1, 128>}, {transform_indices = @transform_9, window_bounds = array<i64: 16, 128>}]} {
    %c0 = arith.constant 0 : index
    %c0_0 = arith.constant 0 : index
    %0 = vector.load %arg1[%c0, %c0_0] : memref<16x128xbf16, #tpu.memory_space<vmem>>, vector<16x128xbf16>
    %c0_1 = arith.constant 0 : index
    %c0_2 = arith.constant 0 : index
    %1 = vector.load %arg2[%c0_1, %c0_2] : memref<128x512xbf16, #tpu.memory_space<vmem>>, vector<128x512xbf16>
    %cst = arith.constant dense<0.000000e+00> : vector<16x512xf32>
    %2 = tpu.matmul %0, %1, %cst {dimension_numbers = #tpu.dot_dimension_numbers<[1], [0], [0], [1], [0, 0, 1, 1], [], []>} : vector<16x128xbf16>, vector<128x512xbf16>, vector<16x512xf32> -> vector<16x512xf32>
    %3 = arith.truncf %2 : vector<16x512xf32> to vector<16x512xbf16>
    %c0_3 = arith.constant 0 : index
    %c0_4 = arith.constant 0 : index
    %4 = vector.load %arg3[%c0_3, %c0_4] : memref<1x512xbf16, #tpu.memory_space<vmem>>, vector<1x512xbf16>
    %5 = vector.broadcast %4 : vector<1x512xbf16> to vector<16x512xbf16>
    %6 = arith.addf %3, %5 : vector<16x512xbf16>
    %cst_5 = arith.constant 0.000000e+00 : bf16
    %7 = vector.broadcast %cst_5 : bf16 to vector<16x512xbf16>
    %8 = arith.maximumf %6, %7 : vector<16x512xbf16>
    %c0_6 = arith.constant 0 : index
    %c0_7 = arith.constant 0 : index
    %9 = vector.load %arg4[%c0_6, %c0_7] : memref<512x512xbf16, #tpu.memory_space<vmem>>, vector<512x512xbf16>
    %cst_8 = arith.constant dense<0.000000e+00> : vector<16x512xf32>
    %10 = tpu.matmul %8, %9, %cst_8 {dimension_numbers = #tpu.dot_dimension_numbers<[1], [0], [0], [1], [0, 0, 1, 1], [], []>} : vector<16x512xbf16>, vector<512x512xbf16>, vector<16x512xf32> -> vector<16x512xf32>
    %11 = arith.truncf %10 : vector<16x512xf32> to vector<16x512xbf16>
    %c0_9 = arith.constant 0 : index
    %c0_10 = arith.constant 0 : index
    %12 = vector.load %arg5[%c0_9, %c0_10] : memref<1x512xbf16, #tpu.memory_space<vmem>>, vector<1x512xbf16>
    %13 = vector.broadcast %12 : vector<1x512xbf16> to vector<16x512xbf16>
    %14 = arith.addf %11, %13 : vector<16x512xbf16>
    %cst_11 = arith.constant 0.000000e+00 : bf16
    %15 = vector.broadcast %cst_11 : bf16 to vector<16x512xbf16>
    %16 = arith.maximumf %14, %15 : vector<16x512xbf16>
    %c0_12 = arith.constant 0 : index
    %c0_13 = arith.constant 0 : index
    %17 = vector.load %arg6[%c0_12, %c0_13] : memref<512x512xbf16, #tpu.memory_space<vmem>>, vector<512x512xbf16>
    %cst_14 = arith.constant dense<0.000000e+00> : vector<16x512xf32>
    %18 = tpu.matmul %16, %17, %cst_14 {dimension_numbers = #tpu.dot_dimension_numbers<[1], [0], [0], [1], [0, 0, 1, 1], [], []>} : vector<16x512xbf16>, vector<512x512xbf16>, vector<16x512xf32> -> vector<16x512xf32>
    %19 = arith.truncf %18 : vector<16x512xf32> to vector<16x512xbf16>
    %c0_15 = arith.constant 0 : index
    %c0_16 = arith.constant 0 : index
    %20 = vector.load %arg7[%c0_15, %c0_16] : memref<1x512xbf16, #tpu.memory_space<vmem>>, vector<1x512xbf16>
    %21 = vector.broadcast %20 : vector<1x512xbf16> to vector<16x512xbf16>
    %22 = arith.addf %19, %21 : vector<16x512xbf16>
    %cst_17 = arith.constant 0.000000e+00 : bf16
    %23 = vector.broadcast %cst_17 : bf16 to vector<16x512xbf16>
    %24 = arith.maximumf %22, %23 : vector<16x512xbf16>
    %c0_18 = arith.constant 0 : index
    %c0_19 = arith.constant 0 : index
    %25 = vector.load %arg8[%c0_18, %c0_19] : memref<512x128xbf16, #tpu.memory_space<vmem>>, vector<512x128xbf16>
    %cst_20 = arith.constant dense<0.000000e+00> : vector<16x128xf32>
    %26 = tpu.matmul %24, %25, %cst_20 {dimension_numbers = #tpu.dot_dimension_numbers<[1], [0], [0], [1], [0, 0, 1, 1], [], []>} : vector<16x512xbf16>, vector<512x128xbf16>, vector<16x128xf32> -> vector<16x128xf32>
    %c0_21 = arith.constant 0 : index
    %c0_22 = arith.constant 0 : index
    %27 = vector.load %arg9[%c0_21, %c0_22] : memref<1x128xf32, #tpu.memory_space<vmem>>, vector<1x128xf32>
    %28 = vector.broadcast %27 : vector<1x128xf32> to vector<16x128xf32>
    %29 = arith.addf %26, %28 : vector<16x128xf32>
    %c0_23 = arith.constant 0 : index
    %c0_24 = arith.constant 0 : index
    %30 = vector.load %arg10[%c0_23, %c0_24] : memref<16x128xf32, #tpu.memory_space<vmem>>, vector<16x128xf32>
    tpu.vector_store %arg10[%c0_23, %c0_24], %29 {strides = array<i32>} : memref<16x128xf32, #tpu.memory_space<vmem>>, vector<16x128xf32>,
    return
  }
  func.func @transform_0(%arg0: i32) -> (i32, i32) {
    %c0_i32 = arith.constant 0 : i32
    %c0_i32_0 = arith.constant 0 : i32
    return %arg0, %c0_i32 : i32, i32
  }
  func.func @transform_1(%arg0: i32) -> (i32, i32) {
    %c0_i32 = arith.constant 0 : i32
    %c0_i32_0 = arith.constant 0 : i32
    %c0_i32_1 = arith.constant 0 : i32
    return %c0_i32, %c0_i32_0 : i32, i32
  }
  func.func @transform_2(%arg0: i32) -> (i32, i32) {
    %c0_i32 = arith.constant 0 : i32
    %c0_i32_0 = arith.constant 0 : i32
    %c0_i32_1 = arith.constant 0 : i32
    return %c0_i32, %c0_i32_0 : i32, i32
  }
  func.func @transform_3(%arg0: i32) -> (i32, i32) {
    %c0_i32 = arith.constant 0 : i32
    %c0_i32_0 = arith.constant 0 : i32
    %c0_i32_1 = arith.constant 0 : i32
    return %c0_i32, %c0_i32_0 : i32, i32
  }
  func.func @transform_4(%arg0: i32) -> (i32, i32) {
    %c0_i32 = arith.constant 0 : i32
    %c0_i32_0 = arith.constant 0 : i32
    %c0_i32_1 = arith.constant 0 : i32
    return %c0_i32, %c0_i32_0 : i32, i32
  }
  func.func @transform_5(%arg0: i32) -> (i32, i32) {
    %c0_i32 = arith.constant 0 : i32
    %c0_i32_0 = arith.constant 0 : i32
    %c0_i32_1 = arith.constant 0 : i32
    return %c0_i32, %c0_i32_0 : i32, i32
  }
  func.func @transform_6(%arg0: i32) -> (i32, i32) {
    %c0_i32 = arith.constant 0 : i32
    %c0_i32_0 = arith.constant 0 : i32
    %c0_i32_1 = arith.constant 0 : i32
    return %c0_i32, %c0_i32_0 : i32, i32
  }
  func.func @transform_7(%arg0: i32) -> (i32, i32) {
    %c0_i32 = arith.constant 0 : i32
    %c0_i32_0 = arith.constant 0 : i32
    %c0_i32_1 = arith.constant 0 : i32
    return %c0_i32, %c0_i32_0 : i32, i32
  }
  func.func @transform_8(%arg0: i32) -> (i32, i32) {
    %c0_i32 = arith.constant 0 : i32
    %c0_i32_0 = arith.constant 0 : i32
    %c0_i32_1 = arith.constant 0 : i32
    return %c0_i32, %c0_i32_0 : i32, i32
  }
  func.func @transform_9(%arg0: i32) -> (i32, i32) {
    %c0_i32 = arith.constant 0 : i32
    %c0_i32_0 = arith.constant 0 : i32
    return %arg0, %c0_i32 : i32, i32
  }
}

</mosaic_0001>

<llo_original>
// kernel: _object_encoder_call.1
$region0: #{_object_encoder_call.1}
  #allocation0 [shape = 'u32[]', space=smem, size = 0x4, offset = 0x4, fixed_abs, tag = 'smem constant byte address 0x4 - core index']
  #allocation1 [shape = 'u32[144,128]{1,0:T(1,128)}', space=vmem, size = 0x12000, scoped, tag = 'internal scratch']
  %s0 = inlined_call_operand.vmem [shape: bf16[16,128], index: 0, kind: input, shape index: {}]
  %s1 = inlined_call_operand.hbm [shape: bf16[128,512], index: 1, kind: input, shape index: {}]
  %s2 = inlined_call_operand.vmem [shape: bf16[1,512], index: 2, kind: input, shape index: {}]
  %s3 = inlined_call_operand.hbm [shape: bf16[512,512], index: 3, kind: input, shape index: {}]
  %s4 = inlined_call_operand.vmem [shape: bf16[1,512], index: 4, kind: input, shape index: {}]
  %s5 = inlined_call_operand.hbm [shape: bf16[512,512], index: 5, kind: input, shape index: {}]
  %s6 = inlined_call_operand.vmem [shape: bf16[1,512], index: 6, kind: input, shape index: {}]
  %s7 = inlined_call_operand.hbm [shape: bf16[512,128], index: 7, kind: input, shape index: {}]
  %s8 = inlined_call_operand.vmem [shape: f32[1,128], index: 8, kind: input, shape index: {}]
  %s9 = inlined_call_operand.vmem [shape: f32[16,128], index: 9, kind: output, shape index: {}]
  %s10 = sld [smem:[#allocation0]]
  $region62: #{_object_encoder_call.1} parent=0
    _
  %s12 = ssub.s32 1, %s10
  %s13 = scalar_select 0, %s12, %s10
  $region1: #{_object_encoder_call.1} parent=0
    #allocation2 [shape = 'u8[131072]{0}', space=vmem, size = 0x20000, scoped, tag = 'input window, operand 1, single buffered']
    #allocation3 [shape = 's32[1]{0}', space=sflag, size = 0x4, scoped, tag = 'scoped memory for _object_encoder_call.1']
    #allocation4 [shape = 'u8[524288]{0}', space=vmem, size = 0x80000, scoped, tag = 'input window, operand 3, single buffered']
    #allocation5 [shape = 's32[1]{0}', space=sflag, size = 0x4, scoped, tag = 'scoped memory for _object_encoder_call.1']
    #allocation6 [shape = 'u8[524288]{0}', space=vmem, size = 0x80000, scoped, tag = 'input window, operand 5, single buffered']
    #allocation7 [shape = 'u8[131072]{0}', space=vmem, size = 0x20000, scoped, tag = 'input window, operand 7, single buffered']
    #allocation8 [shape = 's32[1]{0}', space=sflag, size = 0x4, scoped, tag = 'scoped memory for _object_encoder_call.1']
    %14 = vsyncpa [#allocation3], 0
    %15 = vsyncpa [#allocation5], 0
    %16 = vsyncpa [#allocation8], 0
    // Predicated region
    $region2: #{_object_encoder_call.1} parent=1 // pred_check
      _
    $region3: #{_object_encoder_call.1} parent=1 // pred_check_branch
      %18 = sbr.rel (0) target = $region5
    $region4: #{_object_encoder_call.1} parent=1 // pred_region
      _
    $region5: #{_object_encoder_call.1} parent=1 // pred_fallthru
      _
    // Predicated region
    $region6: #{_object_encoder_call.1} parent=1 // pred_check
      _
    $region7: #{_object_encoder_call.1} parent=1 // pred_check_branch
      %20 = sbr.rel (0) target = $region9
    $region8: #{_object_encoder_call.1} parent=1 // pred_region
      %s22 = ssub.s32 4096, 4096
      %23 = vsyncadd [#allocation3], %s22
      %s24 = sshll.u32 [#allocation2], 4
      %s25 = int_to_ptr.vmem [resolvable:$true] %s24
      %30 = dma.hbm_to_vmem [thread:$0]  %s1, 4096, %s25, [#allocation3], 256, 256, 16
    $region9: #{_object_encoder_call.1} parent=1 // pred_fallthru
      _
    // Predicated region
    $region10: #{_object_encoder_call.1} parent=1 // pred_check
      _
    $region11: #{_object_encoder_call.1} parent=1 // pred_check_branch
      %32 = sbr.rel (0) target = $region13
    $region12: #{_object_encoder_call.1} parent=1 // pred_region
      _
    $region13: #{_object_encoder_call.1} parent=1 // pred_fallthru
      _
    // Predicated region
    $region14: #{_object_encoder_call.1} parent=1 // pred_check
      _
    $region15: #{_object_encoder_call.1} parent=1 // pred_check_branch
      %34 = sbr.rel (0) target = $region17
    $region16: #{_object_encoder_call.1} parent=1 // pred_region
      %s36 = ssub.s32 16384, 16384
      %37 = vsyncadd [#allocation5], %s36
      %s38 = sshll.u32 [#allocation4], 4
      %s39 = int_to_ptr.vmem [resolvable:$true] %s38
      %44 = dma.hbm_to_vmem [thread:$0]  %s3, 16384, %s39, [#allocation5], 256, 256, 16
    $region17: #{_object_encoder_call.1} parent=1 // pred_fallthru
      _
    // Predicated region
    $region18: #{_object_encoder_call.1} parent=1 // pred_check
      _
    $region19: #{_object_encoder_call.1} parent=1 // pred_check_branch
      %46 = sbr.rel (0) target = $region21
    $region20: #{_object_encoder_call.1} parent=1 // pred_region
      _
    $region21: #{_object_encoder_call.1} parent=1 // pred_fallthru
      _
    // Predicated region
    $region22: #{_object_encoder_call.1} parent=1 // pred_check
      _
    $region23: #{_object_encoder_call.1} parent=1 // pred_check_branch
      %48 = sbr.rel (0) target = $region25
    $region24: #{_object_encoder_call.1} parent=1 // pred_region
      %s50 = ssub.s32 16384, 16384
      %51 = vsyncadd [#allocation5], %s50
      %s52 = sshll.u32 [#allocation6], 4
      %s53 = int_to_ptr.vmem [resolvable:$true] %s52
      %58 = dma.hbm_to_vmem [thread:$0]  %s5, 16384, %s53, [#allocation5], 256, 256, 16
    $region25: #{_object_encoder_call.1} parent=1 // pred_fallthru
      _
    // Predicated region
    $region26: #{_object_encoder_call.1} parent=1 // pred_check
      _
    $region27: #{_object_encoder_call.1} parent=1 // pred_check_branch
      %60 = sbr.rel (0) target = $region29
    $region28: #{_object_encoder_call.1} parent=1 // pred_region
      _
    $region29: #{_object_encoder_call.1} parent=1 // pred_fallthru
      _
    // Predicated region
    $region30: #{_object_encoder_call.1} parent=1 // pred_check
      _
    $region31: #{_object_encoder_call.1} parent=1 // pred_check_branch
      %62 = sbr.rel (0) target = $region33
    $region32: #{_object_encoder_call.1} parent=1 // pred_region
      %s64 = ssub.s32 4096, 4096
      %65 = vsyncadd [#allocation8], %s64
      %s66 = sshll.u32 [#allocation7], 4
      %s67 = int_to_ptr.vmem [resolvable:$true] %s66
      %72 = dma.hbm_to_vmem [thread:$0]  %s7, 4096, %s67, [#allocation8], 64, 64, 4
    $region33: #{_object_encoder_call.1} parent=1 // pred_fallthru
      _
    // Predicated region
    $region34: #{_object_encoder_call.1} parent=1 // pred_check
      _
    $region35: #{_object_encoder_call.1} parent=1 // pred_check_branch
      %74 = sbr.rel (0) target = $region37
    $region36: #{_object_encoder_call.1} parent=1 // pred_region
      _
    $region37: #{_object_encoder_call.1} parent=1 // pred_fallthru
      _
    // Predicated region
    $region38: #{_object_encoder_call.1} parent=1 // pred_check
      _
    $region39: #{_object_encoder_call.1} parent=1 // pred_check_branch
      %76 = sbr.rel (0) target = $region41
    $region40: #{_object_encoder_call.1} parent=1 // pred_region
      %77 = dma.done [#allocation3], 4096
    $region41: #{_object_encoder_call.1} parent=1 // pred_fallthru
      _
    // Predicated region
    $region42: #{_object_encoder_call.1} parent=1 // pred_check
      _
    $region43: #{_object_encoder_call.1} parent=1 // pred_check_branch
      %79 = sbr.rel (0) target = $region45
    $region44: #{_object_encoder_call.1} parent=1 // pred_region
      %80 = dma.done [#allocation5], 16384
    $region45: #{_object_encoder_call.1} parent=1 // pred_fallthru
      _
    // Predicated region
    $region46: #{_object_encoder_call.1} parent=1 // pred_check
      _
    $region47: #{_object_encoder_call.1} parent=1 // pred_check_branch
      %82 = sbr.rel (0) target = $region49
    $region48: #{_object_encoder_call.1} parent=1 // pred_region
      %83 = dma.done [#allocation5], 16384
    $region49: #{_object_encoder_call.1} parent=1 // pred_fallthru
      _
    // Predicated region
    $region50: #{_object_encoder_call.1} parent=1 // pred_check
      _
    $region51: #{_object_encoder_call.1} parent=1 // pred_check_branch
      %85 = sbr.rel (0) target = $region53
    $region52: #{_object_encoder_call.1} parent=1 // pred_region
      %86 = dma.done [#allocation8], 4096
    $region53: #{_object_encoder_call.1} parent=1 // pred_fallthru
      _
    %v88 = vld [vmem:[%s0] sm:$0xf]
    %v89 = vld [vmem:[%s0 + $0x4] sm:$0xf]
    %v90 = vld [vmem:[#allocation2] sm:$0xff]
    %v91 = vld [vmem:[#allocation2 + $0x8] sm:$0xff]
    %v92 = vld [vmem:[#allocation2 + $0x10] sm:$0xff]
    %v93 = vld [vmem:[#allocation2 + $0x18] sm:$0xff]
    %v94 = vld [vmem:[#allocation2 + $0x20] sm:$0xff]
    %v95 = vld [vmem:[#allocation2 + $0x28] sm:$0xff]
    %v96 = vld [vmem:[#allocation2 + $0x30] sm:$0xff]
    %v97 = vld [vmem:[#allocation2 + $0x38] sm:$0xff]
    %v98 = vld [vmem:[#allocation2 + $0x40] sm:$0xff]
    %v99 = vld [vmem:[#allocation2 + $0x48] sm:$0xff]
    %v100 = vld [vmem:[#allocation2 + $0x50] sm:$0xff]
    %v101 = vld [vmem:[#allocation2 + $0x58] sm:$0xff]
    %v102 = vld [vmem:[#allocation2 + $0x60] sm:$0xff]
    %v103 = vld [vmem:[#allocation2 + $0x68] sm:$0xff]
    %v104 = vld [vmem:[#allocation2 + $0x70] sm:$0xff]
    %v105 = vld [vmem:[#allocation2 + $0x78] sm:$0xff]
    %v106 = vld [vmem:[#allocation2 + $0x80] sm:$0xff]
    %v107 = vld [vmem:[#allocation2 + $0x88] sm:$0xff]
    %v108 = vld [vmem:[#allocation2 + $0x90] sm:$0xff]
    %v109 = vld [vmem:[#allocation2 + $0x98] sm:$0xff]
    %v110 = vld [vmem:[#allocation2 + $0xa0] sm:$0xff]
    %v111 = vld [vmem:[#allocation2 + $0xa8] sm:$0xff]
    %v112 = vld [vmem:[#allocation2 + $0xb0] sm:$0xff]
    %v113 = vld [vmem:[#allocation2 + $0xb8] sm:$0xff]
    %v114 = vld [vmem:[#allocation2 + $0xc0] sm:$0xff]
    %v115 = vld [vmem:[#allocation2 + $0xc8] sm:$0xff]
    %v116 = vld [vmem:[#allocation2 + $0xd0] sm:$0xff]
    %v117 = vld [vmem:[#allocation2 + $0xd8] sm:$0xff]
    %v118 = vld [vmem:[#allocation2 + $0xe0] sm:$0xff]
    %v119 = vld [vmem:[#allocation2 + $0xe8] sm:$0xff]
    %v120 = vld [vmem:[#allocation2 + $0xf0] sm:$0xff]
    %v121 = vld [vmem:[#allocation2 + $0xf8] sm:$0xff]
    %v124 = vunpack.c.l.b16 %v88
    %v125 = vunpack.c.l.b16 %v89
    %v126 = vpack.c.b16 %v125, %v124
    %v160 = vunpack.c.l.b16 %v90
    %v161 = vunpack.c.h.b16 %v90
    %v162 = vunpack.c.l.b16 %v91
    %v163 = vunpack.c.h.b16 %v91
    %v164 = vunpack.c.l.b16 %v92
    %v165 = vunpack.c.h.b16 %v92
    %v166 = vunpack.c.l.b16 %v93
    %v167 = vunpack.c.h.b16 %v93
    %v168 = vunpack.c.l.b16 %v94
    %v169 = vunpack.c.h.b16 %v94
    %v170 = vunpack.c.l.b16 %v95
    %v171 = vunpack.c.h.b16 %v95
    %v172 = vunpack.c.l.b16 %v96
    %v173 = vunpack.c.h.b16 %v96
    %v174 = vunpack.c.l.b16 %v97
    %v175 = vunpack.c.h.b16 %v97
    %v176 = vunpack.c.l.b16 %v98
    %v177 = vunpack.c.h.b16 %v98
    %v178 = vunpack.c.l.b16 %v99
    %v179 = vunpack.c.h.b16 %v99
    %v180 = vunpack.c.l.b16 %v100
    %v181 = vunpack.c.h.b16 %v100
    %v182 = vunpack.c.l.b16 %v101
    %v183 = vunpack.c.h.b16 %v101
    %v184 = vunpack.c.l.b16 %v102
    %v185 = vunpack.c.h.b16 %v102
    %v186 = vunpack.c.l.b16 %v103
    %v187 = vunpack.c.h.b16 %v103
    %v188 = vunpack.c.l.b16 %v104
    %v189 = vunpack.c.h.b16 %v104
    %v190 = vunpack.c.l.b16 %v105
    %v191 = vunpack.c.h.b16 %v105
    %v192 = vunpack.c.l.b16 %v106
    %v193 = vunpack.c.h.b16 %v106
    %v194 = vunpack.c.l.b16 %v107
    %v195 = vunpack.c.h.b16 %v107
    %v196 = vunpack.c.l.b16 %v108
    %v197 = vunpack.c.h.b16 %v108
    %v198 = vunpack.c.l.b16 %v109
    %v199 = vunpack.c.h.b16 %v109
    %v200 = vunpack.c.l.b16 %v110
    %v201 = vunpack.c.h.b16 %v110
    %v202 = vunpack.c.l.b16 %v111
    %v203 = vunpack.c.h.b16 %v111
    %v204 = vunpack.c.l.b16 %v112
    %v205 = vunpack.c.h.b16 %v112
    %v206 = vunpack.c.l.b16 %v113
    %v207 = vunpack.c.h.b16 %v113
    %v208 = vunpack.c.l.b16 %v114
    %v209 = vunpack.c.h.b16 %v114
    %v210 = vunpack.c.l.b16 %v115
    %v211 = vunpack.c.h.b16 %v115
    %v212 = vunpack.c.l.b16 %v116
    %v213 = vunpack.c.h.b16 %v116
    %v214 = vunpack.c.l.b16 %v117
    %v215 = vunpack.c.h.b16 %v117
    %v216 = vunpack.c.l.b16 %v118
    %v217 = vunpack.c.h.b16 %v118
    %v218 = vunpack.c.l.b16 %v119
    %v219 = vunpack.c.h.b16 %v119
    %v220 = vunpack.c.l.b16 %v120
    %v221 = vunpack.c.h.b16 %v120
    %v222 = vunpack.c.l.b16 %v121
    %v223 = vunpack.c.h.b16 %v121
    %v224 = vpack.c.b16 %v164, %v160
    %v225 = vpack.c.b16 %v165, %v161
    %v226 = vpack.c.b16 %v166, %v162
    %v227 = vpack.c.b16 %v167, %v163
    %v228 = vpack.c.b16 %v172, %v168
    %v229 = vpack.c.b16 %v173, %v169
    %v230 = vpack.c.b16 %v174, %v170
    %v231 = vpack.c.b16 %v175, %v171
    %v232 = vpack.c.b16 %v180, %v176
    %v233 = vpack.c.b16 %v181, %v177
    %v234 = vpack.c.b16 %v182, %v178
    %v235 = vpack.c.b16 %v183, %v179
    %v236 = vpack.c.b16 %v188, %v184
    %v237 = vpack.c.b16 %v189, %v185
    %v238 = vpack.c.b16 %v190, %v186
    %v239 = vpack.c.b16 %v191, %v187
    %v240 = vpack.c.b16 %v196, %v192
    %v241 = vpack.c.b16 %v197, %v193
    %v242 = vpack.c.b16 %v198, %v194
    %v243 = vpack.c.b16 %v199, %v195
    %v244 = vpack.c.b16 %v204, %v200
    %v245 = vpack.c.b16 %v205, %v201
    %v246 = vpack.c.b16 %v206, %v202
    %v247 = vpack.c.b16 %v207, %v203
    %v248 = vpack.c.b16 %v212, %v208
    %v249 = vpack.c.b16 %v213, %v209
    %v250 = vpack.c.b16 %v214, %v210
    %v251 = vpack.c.b16 %v215, %v211
    %v252 = vpack.c.b16 %v220, %v216
    %v253 = vpack.c.b16 %v221, %v217
    %v254 = vpack.c.b16 %v222, %v218
    %v255 = vpack.c.b16 %v223, %v219
    %288 = vmatprep.subr.bf16.mxu0 %v225
    %289 = vmatpush1.bf16.msra.mxu0 %v224
    %290 = vmatprep.subr.bf16.mxu0 %v229
    %291 = vmatpush1.bf16.msra.mxu0 %v228
    %292 = vmatprep.subr.bf16.mxu0 %v233
    %293 = vmatpush1.bf16.msra.mxu0 %v232
    %294 = vmatprep.subr.bf16.mxu0 %v237
    %295 = vmatpush1.bf16.msra.mxu0 %v236
    %296 = vmatprep.subr.bf16.mxu0 %v241
    %297 = vmatpush1.bf16.msra.mxu0 %v240
    %298 = vmatprep.subr.bf16.mxu0 %v245
    %299 = vmatpush1.bf16.msra.mxu0 %v244
    %300 = vmatprep.subr.bf16.mxu0 %v249
    %301 = vmatpush1.bf16.msra.mxu0 %v248
    %302 = vmatprep.subr.bf16.mxu0 %v253
    %303 = vmatpush1.bf16.msra.mxu0 %v252
    %304 = vmatprep.subr.bf16.mxu0 0
    %305 = vmatpush1.bf16.msra.mxu0 0
    %306 = vmatprep.subr.bf16.mxu0 0
    %307 = vmatpush1.bf16.msra.mxu0 0
    %308 = vmatprep.subr.bf16.mxu0 0
    %309 = vmatpush1.bf16.msra.mxu0 0
    %310 = vmatprep.subr.bf16.mxu0 0
    %311 = vmatpush1.bf16.msra.mxu0 0
    %312 = vmatprep.subr.bf16.mxu0 0
    %313 = vmatpush1.bf16.msra.mxu0 0
    %314 = vmatprep.subr.bf16.mxu0 0
    %315 = vmatpush1.bf16.msra.mxu0 0
    %316 = vmatprep.subr.bf16.mxu0 0
    %317 = vmatpush1.bf16.msra.mxu0 0
    %318 = vmatprep.subr.bf16.mxu0 0
    %319 = vmatpush1.bf16.msra.mxu0 0
    %320 = vmatprep.mubr.bf16.mxu0 0
    %321 = vmatmul.mubr.bf16.gmra.mrb[0].mxu0 %v126
    %v322 = vpop.f32.mrb[0].mxu0
    %v323 = vadd.f32 0.0, %v322
    %v324 = vpop.f32.mrb[0].mxu0
    %v325 = vadd.f32 0.0, %v324
    %v326 = vpop.f32.mrb[0].mxu0
    %v327 = vadd.f32 0.0, %v326
    %v328 = vpop.f32.mrb[0].mxu0
    %v329 = vadd.f32 0.0, %v328
    %330 = vdwg.mxu0
    %331 = vmatprep.subr.bf16.mxu0 %v227
    %332 = vmatpush1.bf16.msra.mxu0 %v226
    %333 = vmatprep.subr.bf16.mxu0 %v231
    %334 = vmatpush1.bf16.msra.mxu0 %v230
    %335 = vmatprep.subr.bf16.mxu0 %v235
    %336 = vmatpush1.bf16.msra.mxu0 %v234
    %337 = vmatprep.subr.bf16.mxu0 %v239
    %338 = vmatpush1.bf16.msra.mxu0 %v238
    %339 = vmatprep.subr.bf16.mxu0 %v243
    %340 = vmatpush1.bf16.msra.mxu0 %v242
    %341 = vmatprep.subr.bf16.mxu0 %v247
    %342 = vmatpush1.bf16.msra.mxu0 %v246
    %343 = vmatprep.subr.bf16.mxu0 %v251
    %344 = vmatpush1.bf16.msra.mxu0 %v250
    %345 = vmatprep.subr.bf16.mxu0 %v255
    %346 = vmatpush1.bf16.msra.mxu0 %v254
    %347 = vmatprep.subr.bf16.mxu0 0
    %348 = vmatpush1.bf16.msra.mxu0 0
    %349 = vmatprep.subr.bf16.mxu0 0
    %350 = vmatpush1.bf16.msra.mxu0 0
    %351 = vmatprep.subr.bf16.mxu0 0
    %352 = vmatpush1.bf16.msra.mxu0 0
    %353 = vmatprep.subr.bf16.mxu0 0
    %354 = vmatpush1.bf16.msra.mxu0 0
    %355 = vmatprep.subr.bf16.mxu0 0
    %356 = vmatpush1.bf16.msra.mxu0 0
    %357 = vmatprep.subr.bf16.mxu0 0
    %358 = vmatpush1.bf16.msra.mxu0 0
    %359 = vmatprep.subr.bf16.mxu0 0
    %360 = vmatpush1.bf16.msra.mxu0 0
    %361 = vmatprep.subr.bf16.mxu0 0
    %362 = vmatpush1.bf16.msra.mxu0 0
    %363 = vmatprep.mubr.bf16.mxu0 0
    %364 = vmatmul.mubr.bf16.gmra.mrb[0].mxu0 %v126
    %v365 = vpop.f32.mrb[0].mxu0
    %v366 = vadd.f32 0.0, %v365
    %v367 = vpop.f32.mrb[0].mxu0
    %v368 = vadd.f32 0.0, %v367
    %v369 = vpop.f32.mrb[0].mxu0
    %v370 = vadd.f32 0.0, %v369
    %v371 = vpop.f32.mrb[0].mxu0
    %v372 = vadd.f32 0.0, %v371
    %373 = vdwg.mxu0
    %v374 = vpack.c.bf16 %v327, %v323
    %v375 = vpack.c.bf16 %v329, %v325
    %v376 = vpack.c.bf16 %v370, %v366
    %v377 = vpack.c.bf16 %v372, %v368
    %v378 = vld [vmem:[%s2] sm:$0xf]
    %v381 = vunpack.c.l.s4 1966171168
    %v382 = vunpack.c.0.s8 %v381
    %v383 = vlaneseq
    %v384 = vshrl.u32 %v383, 7
    %v385 = vsub.s32 %v382, %v384
    %v386 = vrot.slane %v378, %v385
    %v387 = vcombine.high %v386, %v386
    %v389 = vunpack.c.l.s4 1966171168
    %v390 = vunpack.c.0.s8 %v389
    %v391 = vlaneseq
    %v392 = vshrl.u32 %v391, 7
    %v393 = vsub.s32 %v390, %v392
    %v394 = vrot.slane %v386, %v393
    %v396 = vunpack.c.l.s4 1966171168
    %v397 = vunpack.c.0.s8 %v396
    %v398 = vlaneseq
    %v399 = vshrl.u32 %v398, 7
    %v400 = vsub.s32 %v397, %v399
    %v401 = vrot.slane %v387, %v400
    %v402 = vcombine.high %v394, %v394
    %v403 = vcombine.high %v401, %v401
    %v405 = vpack.i.b16 %v394, %v394
    %v407 = vlaneseq
    %v408 = vshrl.u32 %v407, 7
    %v409 = vsub.s32 0, %v408
    %v410 = vrot.slane %v405, %v409
    %v412 = vpack.i.b16 %v401, %v401
    %v414 = vlaneseq
    %v415 = vshrl.u32 %v414, 7
    %v416 = vsub.s32 0, %v415
    %v417 = vrot.slane %v412, %v416
    %v419 = vpack.i.b16 %v402, %v402
    %v421 = vlaneseq
    %v422 = vshrl.u32 %v421, 7
    %v423 = vsub.s32 0, %v422
    %v424 = vrot.slane %v419, %v423
    %v426 = vpack.i.b16 %v403, %v403
    %v428 = vlaneseq
    %v429 = vshrl.u32 %v428, 7
    %v430 = vsub.s32 0, %v429
    %v431 = vrot.slane %v426, %v430
    %v432 = vadd.bf16 %v374, %v410
    %v433 = vadd.bf16 %v375, %v417
    %v434 = vadd.bf16 %v376, %v424
    %v435 = vadd.bf16 %v377, %v431
    %v436 = vmax.bf16 %v432, 0
    %v437 = vmax.bf16 %v433, 0
    %v438 = vmax.bf16 %v434, 0
    %v439 = vmax.bf16 %v435, 0
    %v440 = vld [vmem:[#allocation4] sm:$0xff]
    %v441 = vld [vmem:[#allocation4 + $0x8] sm:$0xff]
    %v442 = vld [vmem:[#allocation4 + $0x10] sm:$0xff]
    %v443 = vld [vmem:[#allocation4 + $0x18] sm:$0xff]
    %v444 = vld [vmem:[#allocation4 + $0x20] sm:$0xff]
    %v445 = vld [vmem:[#allocation4 + $0x28] sm:$0xff]
    %v446 = vld [vmem:[#allocation4 + $0x30] sm:$0xff]
    %v447 = vld [vmem:[#allocation4 + $0x38] sm:$0xff]
    %v448 = vld [vmem:[#allocation4 + $0x40] sm:$0xff]
    %v449 = vld [vmem:[#allocation4 + $0x48] sm:$0xff]
    %v450 = vld [vmem:[#allocation4 + $0x50] sm:$0xff]
    %v451 = vld [vmem:[#allocation4 + $0x58] sm:$0xff]
    %v452 = vld [vmem:[#allocation4 + $0x60] sm:$0xff]
    %v453 = vld [vmem:[#allocation4 + $0x68] sm:$0xff]
    %v454 = vld [vmem:[#allocation4 + $0x70] sm:$0xff]
    %v455 = vld [vmem:[#allocation4 + $0x78] sm:$0xff]
    %v456 = vld [vmem:[#allocation4 + $0x80] sm:$0xff]
    %v457 = vld [vmem:[#allocation4 + $0x88] sm:$0xff]
    %v458 = vld [vmem:[#allocation4 + $0x90] sm:$0xff]
    %v459 = vld [vmem:[#allocation4 + $0x98] sm:$0xff]
    %v460 = vld [vmem:[#allocation4 + $0xa0] sm:$0xff]
    %v461 = vld [vmem:[#allocation4 + $0xa8] sm:$0xff]
    %v462 = vld [vmem:[#allocation4 + $0xb0] sm:$0xff]
    %v463 = vld [vmem:[#allocation4 + $0xb8] sm:$0xff]
    %v464 = vld [vmem:[#allocation4 + $0xc0] sm:$0xff]
    %v465 = vld [vmem:[#allocation4 + $0xc8] sm:$0xff]
    %v466 = vld [vmem:[#allocation4 + $0xd0] sm:$0xff]
    %v467 = vld [vmem:[#allocation4 + $0xd8] sm:$0xff]
    %v468 = vld [vmem:[#allocation4 + $0xe0] sm:$0xff]
    %v469 = vld [vmem:[#allocation4 + $0xe8] sm:$0xff]
    %v470 = vld [vmem:[#allocation4 + $0xf0] sm:$0xff]
    %v471 = vld [vmem:[#allocation4 + $0xf8] sm:$0xff]
    %v472 = vld [vmem:[#allocation4 + $0x100] sm:$0xff]
    %v473 = vld [vmem:[#allocation4 + $0x108] sm:$0xff]
    %v474 = vld [vmem:[#allocation4 + $0x110] sm:$0xff]
    %v475 = vld [vmem:[#allocation4 + $0x118] sm:$0xff]
    %v476 = vld [vmem:[#allocation4 + $0x120] sm:$0xff]
    %v477 = vld [vmem:[#allocation4 + $0x128] sm:$0xff]
    %v478 = vld [vmem:[#allocation4 + $0x130] sm:$0xff]
    %v479 = vld [vmem:[#allocation4 + $0x138] sm:$0xff]
    %v480 = vld [vmem:[#allocation4 + $0x140] sm:$0xff]
    %v481 = vld [vmem:[#allocation4 + $0x148] sm:$0xff]
    %v482 = vld [vmem:[#allocation4 + $0x150] sm:$0xff]
    %v483 = vld [vmem:[#allocation4 + $0x158] sm:$0xff]
    %v484 = vld [vmem:[#allocation4 + $0x160] sm:$0xff]
    %v485 = vld [vmem:[#allocation4 + $0x168] sm:$0xff]
    %v486 = vld [vmem:[#allocation4 + $0x170] sm:$0xff]
    %v487 = vld [vmem:[#allocation4 + $0x178] sm:$0xff]
    %v488 = vld [vmem:[#allocation4 + $0x180] sm:$0xff]
    %v489 = vld [vmem:[#allocation4 + $0x188] sm:$0xff]
    %v490 = vld [vmem:[#allocation4 + $0x190] sm:$0xff]
    %v491 = vld [vmem:[#allocation4 + $0x198] sm:$0xff]
    %v492 = vld [vmem:[#allocation4 + $0x1a0] sm:$0xff]
    %v493 = vld [vmem:[#allocation4 + $0x1a8] sm:$0xff]
    %v494 = vld [vmem:[#allocation4 + $0x1b0] sm:$0xff]
    %v495 = vld [vmem:[#allocation4 + $0x1b8] sm:$0xff]
    %v496 = vld [vmem:[#allocation4 + $0x1c0] sm:$0xff]
    %v497 = vld [vmem:[#allocation4 + $0x1c8] sm:$0xff]
    %v498 = vld [vmem:[#allocation4 + $0x1d0] sm:$0xff]
    %v499 = vld [vmem:[#allocation4 + $0x1d8] sm:$0xff]
    %v500 = vld [vmem:[#allocation4 + $0x1e0] sm:$0xff]
    %v501 = vld [vmem:[#allocation4 + $0x1e8] sm:$0xff]
    %v502 = vld [vmem:[#allocation4 + $0x1f0] sm:$0xff]
    %v503 = vld [vmem:[#allocation4 + $0x1f8] sm:$0xff]
    %v504 = vld [vmem:[#allocation4 + $0x200] sm:$0xff]
    %v505 = vld [vmem:[#allocation4 + $0x208] sm:$0xff]
    %v506 = vld [vmem:[#allocation4 + $0x210] sm:$0xff]
    %v507 = vld [vmem:[#allocation4 + $0x218] sm:$0xff]
    %v508 = vld [vmem:[#allocation4 + $0x220] sm:$0xff]
    %v509 = vld [vmem:[#allocation4 + $0x228] sm:$0xff]
    %v510 = vld [vmem:[#allocation4 + $0x230] sm:$0xff]
    %v511 = vld [vmem:[#allocation4 + $0x238] sm:$0xff]
    %v512 = vld [vmem:[#allocation4 + $0x240] sm:$0xff]
    %v513 = vld [vmem:[#allocation4 + $0x248] sm:$0xff]
    %v514 = vld [vmem:[#allocation4 + $0x250] sm:$0xff]
    %v515 = vld [vmem:[#allocation4 + $0x258] sm:$0xff]
    %v516 = vld [vmem:[#allocation4 + $0x260] sm:$0xff]
    %v517 = vld [vmem:[#allocation4 + $0x268] sm:$0xff]
    %v518 = vld [vmem:[#allocation4 + $0x270] sm:$0xff]
    %v519 = vld [vmem:[#allocation4 + $0x278] sm:$0xff]
    %v520 = vld [vmem:[#allocation4 + $0x280] sm:$0xff]
    %v521 = vld [vmem:[#allocation4 + $0x288] sm:$0xff]
    %v522 = vld [vmem:[#allocation4 + $0x290] sm:$0xff]
    %v523 = vld [vmem:[#allocation4 + $0x298] sm:$0xff]
    %v524 = vld [vmem:[#allocation4 + $0x2a0] sm:$0xff]
    %v525 = vld [vmem:[#allocation4 + $0x2a8] sm:$0xff]
    %v526 = vld [vmem:[#allocation4 + $0x2b0] sm:$0xff]
    %v527 = vld [vmem:[#allocation4 + $0x2b8] sm:$0xff]
    %v528 = vld [vmem:[#allocation4 + $0x2c0] sm:$0xff]
    %v529 = vld [vmem:[#allocation4 + $0x2c8] sm:$0xff]
    %v530 = vld [vmem:[#allocation4 + $0x2d0] sm:$0xff]
    %v531 = vld [vmem:[#allocation4 + $0x2d8] sm:$0xff]
    %v532 = vld [vmem:[#allocation4 + $0x2e0] sm:$0xff]
    %v533 = vld [vmem:[#allocation4 + $0x2e8] sm:$0xff]
    %v534 = vld [vmem:[#allocation4 + $0x2f0] sm:$0xff]
    %v535 = vld [vmem:[#allocation4 + $0x2f8] sm:$0xff]
    %v536 = vld [vmem:[#allocation4 + $0x300] sm:$0xff]
    %v537 = vld [vmem:[#allocation4 + $0x308] sm:$0xff]
    %v538 = vld [vmem:[#allocation4 + $0x310] sm:$0xff]
    %v539 = vld [vmem:[#allocation4 + $0x318] sm:$0xff]
    %v540 = vld [vmem:[#allocation4 + $0x320] sm:$0xff]
    %v541 = vld [vmem:[#allocation4 + $0x328] sm:$0xff]
    %v542 = vld [vmem:[#allocation4 + $0x330] sm:$0xff]
    %v543 = vld [vmem:[#allocation4 + $0x338] sm:$0xff]
    %v544 = vld [vmem:[#allocation4 + $0x340] sm:$0xff]
    %v545 = vld [vmem:[#allocation4 + $0x348] sm:$0xff]
    %v546 = vld [vmem:[#allocation4 + $0x350] sm:$0xff]
    %v547 = vld [vmem:[#allocation4 + $0x358] sm:$0xff]
    %v548 = vld [vmem:[#allocation4 + $0x360] sm:$0xff]
    %v549 = vld [vmem:[#allocation4 + $0x368] sm:$0xff]
    %v550 = vld [vmem:[#allocation4 + $0x370] sm:$0xff]
    %v551 = vld [vmem:[#allocation4 + $0x378] sm:$0xff]
    %v552 = vld [vmem:[#allocation4 + $0x380] sm:$0xff]
    %v553 = vld [vmem:[#allocation4 + $0x388] sm:$0xff]
    %v554 = vld [vmem:[#allocation4 + $0x390] sm:$0xff]
    %v555 = vld [vmem:[#allocation4 + $0x398] sm:$0xff]
    %v556 = vld [vmem:[#allocation4 + $0x3a0] sm:$0xff]
    %v557 = vld [vmem:[#allocation4 + $0x3a8] sm:$0xff]
    %v558 = vld [vmem:[#allocation4 + $0x3b0] sm:$0xff]
    %v559 = vld [vmem:[#allocation4 + $0x3b8] sm:$0xff]
    %v560 = vld [vmem:[#allocation4 + $0x3c0] sm:$0xff]
    %v561 = vld [vmem:[#allocation4 + $0x3c8] sm:$0xff]
    %v562 = vld [vmem:[#allocation4 + $0x3d0] sm:$0xff]
    %v563 = vld [vmem:[#allocation4 + $0x3d8] sm:$0xff]
    %v564 = vld [vmem:[#allocation4 + $0x3e0] sm:$0xff]
    %v565 = vld [vmem:[#allocation4 + $0x3e8] sm:$0xff]
    %v566 = vld [vmem:[#allocation4 + $0x3f0] sm:$0xff]
    %v567 = vld [vmem:[#allocation4 + $0x3f8] sm:$0xff]
    %v696 = vunpack.c.l.b16 %v440
    %v697 = vunpack.c.h.b16 %v440
    %v698 = vunpack.c.l.b16 %v441
    %v699 = vunpack.c.h.b16 %v441
    %v700 = vunpack.c.l.b16 %v442
    %v701 = vunpack.c.h.b16 %v442
    %v702 = vunpack.c.l.b16 %v443
    %v703 = vunpack.c.h.b16 %v443
    %v704 = vunpack.c.l.b16 %v444
    %v705 = vunpack.c.h.b16 %v444
    %v706 = vunpack.c.l.b16 %v445
    %v707 = vunpack.c.h.b16 %v445
    %v708 = vunpack.c.l.b16 %v446
    %v709 = vunpack.c.h.b16 %v446
    %v710 = vunpack.c.l.b16 %v447
    %v711 = vunpack.c.h.b16 %v447
    %v712 = vunpack.c.l.b16 %v448
    %v713 = vunpack.c.h.b16 %v448
    %v714 = vunpack.c.l.b16 %v449
    %v715 = vunpack.c.h.b16 %v449
    %v716 = vunpack.c.l.b16 %v450
    %v717 = vunpack.c.h.b16 %v450
    %v718 = vunpack.c.l.b16 %v451
    %v719 = vunpack.c.h.b16 %v451
    %v720 = vunpack.c.l.b16 %v452
    %v721 = vunpack.c.h.b16 %v452
    %v722 = vunpack.c.l.b16 %v453
    %v723 = vunpack.c.h.b16 %v453
    %v724 = vunpack.c.l.b16 %v454
    %v725 = vunpack.c.h.b16 %v454
    %v726 = vunpack.c.l.b16 %v455
    %v727 = vunpack.c.h.b16 %v455
    %v728 = vunpack.c.l.b16 %v456
    %v729 = vunpack.c.h.b16 %v456
    %v730 = vunpack.c.l.b16 %v457
    %v731 = vunpack.c.h.b16 %v457
    %v732 = vunpack.c.l.b16 %v458
    %v733 = vunpack.c.h.b16 %v458
    %v734 = vunpack.c.l.b16 %v459
    %v735 = vunpack.c.h.b16 %v459
    %v736 = vunpack.c.l.b16 %v460
    %v737 = vunpack.c.h.b16 %v460
    %v738 = vunpack.c.l.b16 %v461
    %v739 = vunpack.c.h.b16 %v461
    %v740 = vunpack.c.l.b16 %v462
    %v741 = vunpack.c.h.b16 %v462
    %v742 = vunpack.c.l.b16 %v463
    %v743 = vunpack.c.h.b16 %v463
    %v744 = vunpack.c.l.b16 %v464
    %v745 = vunpack.c.h.b16 %v464
    %v746 = vunpack.c.l.b16 %v465
    %v747 = vunpack.c.h.b16 %v465
    %v748 = vunpack.c.l.b16 %v466
    %v749 = vunpack.c.h.b16 %v466
    %v750 = vunpack.c.l.b16 %v467
    %v751 = vunpack.c.h.b16 %v467
    %v752 = vunpack.c.l.b16 %v468
    %v753 = vunpack.c.h.b16 %v468
    %v754 = vunpack.c.l.b16 %v469
    %v755 = vunpack.c.h.b16 %v469
    %v756 = vunpack.c.l.b16 %v470
    %v757 = vunpack.c.h.b16 %v470
    %v758 = vunpack.c.l.b16 %v471
    %v759 = vunpack.c.h.b16 %v471
    %v760 = vunpack.c.l.b16 %v472
    %v761 = vunpack.c.h.b16 %v472
    %v762 = vunpack.c.l.b16 %v473
    %v763 = vunpack.c.h.b16 %v473
    %v764 = vunpack.c.l.b16 %v474
    %v765 = vunpack.c.h.b16 %v474
    %v766 = vunpack.c.l.b16 %v475
    %v767 = vunpack.c.h.b16 %v475
    %v768 = vunpack.c.l.b16 %v476
    %v769 = vunpack.c.h.b16 %v476
    %v770 = vunpack.c.l.b16 %v477
    %v771 = vunpack.c.h.b16 %v477
    %v772 = vunpack.c.l.b16 %v478
    %v773 = vunpack.c.h.b16 %v478
    %v774 = vunpack.c.l.b16 %v479
    %v775 = vunpack.c.h.b16 %v479
    %v776 = vunpack.c.l.b16 %v480
    %v777 = vunpack.c.h.b16 %v480
    %v778 = vunpack.c.l.b16 %v481
    %v779 = vunpack.c.h.b16 %v481
    %v780 = vunpack.c.l.b16 %v482
    %v781 = vunpack.c.h.b16 %v482
    %v782 = vunpack.c.l.b16 %v483
    %v783 = vunpack.c.h.b16 %v483
    %v784 = vunpack.c.l.b16 %v484
    %v785 = vunpack.c.h.b16 %v484
    %v786 = vunpack.c.l.b16 %v485
    %v787 = vunpack.c.h.b16 %v485
    %v788 = vunpack.c.l.b16 %v486
    %v789 = vunpack.c.h.b16 %v486
    %v790 = vunpack.c.l.b16 %v487
    %v791 = vunpack.c.h.b16 %v487
    %v792 = vunpack.c.l.b16 %v488
    %v793 = vunpack.c.h.b16 %v488
    %v794 = vunpack.c.l.b16 %v489
    %v795 = vunpack.c.h.b16 %v489
    %v796 = vunpack.c.l.b16 %v490
    %v797 = vunpack.c.h.b16 %v490
    %v798 = vunpack.c.l.b16 %v491
    %v799 = vunpack.c.h.b16 %v491
    %v800 = vunpack.c.l.b16 %v492
    %v801 = vunpack.c.h.b16 %v492
    %v802 = vunpack.c.l.b16 %v493
    %v803 = vunpack.c.h.b16 %v493
    %v804 = vunpack.c.l.b16 %v494
    %v805 = vunpack.c.h.b16 %v494
    %v806 = vunpack.c.l.b16 %v495
    %v807 = vunpack.c.h.b16 %v495
    %v808 = vunpack.c.l.b16 %v496
    %v809 = vunpack.c.h.b16 %v496
    %v810 = vunpack.c.l.b16 %v497
    %v811 = vunpack.c.h.b16 %v497
    %v812 = vunpack.c.l.b16 %v498
    %v813 = vunpack.c.h.b16 %v498
    %v814 = vunpack.c.l.b16 %v499
    %v815 = vunpack.c.h.b16 %v499
    %v816 = vunpack.c.l.b16 %v500
    %v817 = vunpack.c.h.b16 %v500
    %v818 = vunpack.c.l.b16 %v501
    %v819 = vunpack.c.h.b16 %v501
    %v820 = vunpack.c.l.b16 %v502
    %v821 = vunpack.c.h.b16 %v502
    %v822 = vunpack.c.l.b16 %v503
    %v823 = vunpack.c.h.b16 %v503
    %v824 = vunpack.c.l.b16 %v504
    %v825 = vunpack.c.h.b16 %v504
    %v826 = vunpack.c.l.b16 %v505
    %v827 = vunpack.c.h.b16 %v505
    %v828 = vunpack.c.l.b16 %v506
    %v829 = vunpack.c.h.b16 %v506
    %v830 = vunpack.c.l.b16 %v507
    %v831 = vunpack.c.h.b16 %v507
    %v832 = vunpack.c.l.b16 %v508
    %v833 = vunpack.c.h.b16 %v508
    %v834 = vunpack.c.l.b16 %v509
    %v835 = vunpack.c.h.b16 %v509
    %v836 = vunpack.c.l.b16 %v510
    %v837 = vunpack.c.h.b16 %v510
    %v838 = vunpack.c.l.b16 %v511
    %v839 = vunpack.c.h.b16 %v511
    %v840 = vunpack.c.l.b16 %v512
    %v841 = vunpack.c.h.b16 %v512
    %v842 = vunpack.c.l.b16 %v513
    %v843 = vunpack.c.h.b16 %v513
    %v844 = vunpack.c.l.b16 %v514
    %v845 = vunpack.c.h.b16 %v514
    %v846 = vunpack.c.l.b16 %v515
    %v847 = vunpack.c.h.b16 %v515
    %v848 = vunpack.c.l.b16 %v516
    %v849 = vunpack.c.h.b16 %v516
    %v850 = vunpack.c.l.b16 %v517
    %v851 = vunpack.c.h.b16 %v517
    %v852 = vunpack.c.l.b16 %v518
    %v853 = vunpack.c.h.b16 %v518
    %v854 = vunpack.c.l.b16 %v519
    %v855 = vunpack.c.h.b16 %v519
    %v856 = vunpack.c.l.b16 %v520
    %v857 = vunpack.c.h.b16 %v520
    %v858 = vunpack.c.l.b16 %v521
    %v859 = vunpack.c.h.b16 %v521
    %v860 = vunpack.c.l.b16 %v522
    %v861 = vunpack.c.h.b16 %v522
    %v862 = vunpack.c.l.b16 %v523
    %v863 = vunpack.c.h.b16 %v523
    %v864 = vunpack.c.l.b16 %v524
    %v865 = vunpack.c.h.b16 %v524
    %v866 = vunpack.c.l.b16 %v525
    %v867 = vunpack.c.h.b16 %v525
    %v868 = vunpack.c.l.b16 %v526
    %v869 = vunpack.c.h.b16 %v526
    %v870 = vunpack.c.l.b16 %v527
    %v871 = vunpack.c.h.b16 %v527
    %v872 = vunpack.c.l.b16 %v528
    %v873 = vunpack.c.h.b16 %v528
    %v874 = vunpack.c.l.b16 %v529
    %v875 = vunpack.c.h.b16 %v529
    %v876 = vunpack.c.l.b16 %v530
    %v877 = vunpack.c.h.b16 %v530
    %v878 = vunpack.c.l.b16 %v531
    %v879 = vunpack.c.h.b16 %v531
    %v880 = vunpack.c.l.b16 %v532
    %v881 = vunpack.c.h.b16 %v532
    %v882 = vunpack.c.l.b16 %v533
    %v883 = vunpack.c.h.b16 %v533
    %v884 = vunpack.c.l.b16 %v534
    %v885 = vunpack.c.h.b16 %v534
    %v886 = vunpack.c.l.b16 %v535
    %v887 = vunpack.c.h.b16 %v535
    %v888 = vunpack.c.l.b16 %v536
    %v889 = vunpack.c.h.b16 %v536
    %v890 = vunpack.c.l.b16 %v537
    %v891 = vunpack.c.h.b16 %v537
    %v892 = vunpack.c.l.b16 %v538
    %v893 = vunpack.c.h.b16 %v538
    %v894 = vunpack.c.l.b16 %v539
    %v895 = vunpack.c.h.b16 %v539
    %v896 = vunpack.c.l.b16 %v540
    %v897 = vunpack.c.h.b16 %v540
    %v898 = vunpack.c.l.b16 %v541
    %v899 = vunpack.c.h.b16 %v541
    %v900 = vunpack.c.l.b16 %v542
    %v901 = vunpack.c.h.b16 %v542
    %v902 = vunpack.c.l.b16 %v543
    %v903 = vunpack.c.h.b16 %v543
    %v904 = vunpack.c.l.b16 %v544
    %v905 = vunpack.c.h.b16 %v544
    %v906 = vunpack.c.l.b16 %v545
    %v907 = vunpack.c.h.b16 %v545
    %v908 = vunpack.c.l.b16 %v546
    %v909 = vunpack.c.h.b16 %v546
    %v910 = vunpack.c.l.b16 %v547
    %v911 = vunpack.c.h.b16 %v547
    %v912 = vunpack.c.l.b16 %v548
    %v913 = vunpack.c.h.b16 %v548
    %v914 = vunpack.c.l.b16 %v549
    %v915 = vunpack.c.h.b16 %v549
    %v916 = vunpack.c.l.b16 %v550
    %v917 = vunpack.c.h.b16 %v550
    %v918 = vunpack.c.l.b16 %v551
    %v919 = vunpack.c.h.b16 %v551
    %v920 = vunpack.c.l.b16 %v552
    %v921 = vunpack.c.h.b16 %v552
    %v922 = vunpack.c.l.b16 %v553
    %v923 = vunpack.c.h.b16 %v553
    %v924 = vunpack.c.l.b16 %v554
    %v925 = vunpack.c.h.b16 %v554
    %v926 = vunpack.c.l.b16 %v555
    %v927 = vunpack.c.h.b16 %v555
    %v928 = vunpack.c.l.b16 %v556
    %v929 = vunpack.c.h.b16 %v556
    %v930 = vunpack.c.l.b16 %v557
    %v931 = vunpack.c.h.b16 %v557
    %v932 = vunpack.c.l.b16 %v558
    %v933 = vunpack.c.h.b16 %v558
    %v934 = vunpack.c.l.b16 %v559
    %v935 = vunpack.c.h.b16 %v559
    %v936 = vunpack.c.l.b16 %v560
    %v937 = vunpack.c.h.b16 %v560
    %v938 = vunpack.c.l.b16 %v561
    %v939 = vunpack.c.h.b16 %v561
    %v940 = vunpack.c.l.b16 %v562
    %v941 = vunpack.c.h.b16 %v562
    %v942 = vunpack.c.l.b16 %v563
    %v943 = vunpack.c.h.b16 %v563
    %v944 = vunpack.c.l.b16 %v564
    %v945 = vunpack.c.h.b16 %v564
    %v946 = vunpack.c.l.b16 %v565
    %v947 = vunpack.c.h.b16 %v565
    %v948 = vunpack.c.l.b16 %v566
    %v949 = vunpack.c.h.b16 %v566
    %v950 = vunpack.c.l.b16 %v567
    %v951 = vunpack.c.h.b16 %v567
    %v952 = vpack.c.b16 %v700, %v696
    %v953 = vpack.c.b16 %v701, %v697
    %v954 = vpack.c.b16 %v702, %v698
    %v955 = vpack.c.b16 %v703, %v699
    %v956 = vpack.c.b16 %v708, %v704
    %v957 = vpack.c.b16 %v709, %v705
    %v958 = vpack.c.b16 %v710, %v706
    %v959 = vpack.c.b16 %v711, %v707
    %v960 = vpack.c.b16 %v716, %v712
    %v961 = vpack.c.b16 %v717, %v713
    %v962 = vpack.c.b16 %v718, %v714
    %v963 = vpack.c.b16 %v719, %v715
    %v964 = vpack.c.b16 %v724, %v720
    %v965 = vpack.c.b16 %v725, %v721
    %v966 = vpack.c.b16 %v726, %v722
    %v967 = vpack.c.b16 %v727, %v723
    %v968 = vpack.c.b16 %v732, %v728
    %v969 = vpack.c.b16 %v733, %v729
    %v970 = vpack.c.b16 %v734, %v730
    %v971 = vpack.c.b16 %v735, %v731
    %v972 = vpack.c.b16 %v740, %v736
    %v973 = vpack.c.b16 %v741, %v737
    %v974 = vpack.c.b16 %v742, %v738
    %v975 = vpack.c.b16 %v743, %v739
    %v976 = vpack.c.b16 %v748, %v744
    %v977 = vpack.c.b16 %v749, %v745
    %v978 = vpack.c.b16 %v750, %v746
    %v979 = vpack.c.b16 %v751, %v747
    %v980 = vpack.c.b16 %v756, %v752
    %v981 = vpack.c.b16 %v757, %v753
    %v982 = vpack.c.b16 %v758, %v754
    %v983 = vpack.c.b16 %v759, %v755
    %v984 = vpack.c.b16 %v764, %v760
    %v985 = vpack.c.b16 %v765, %v761
    %v986 = vpack.c.b16 %v766, %v762
    %v987 = vpack.c.b16 %v767, %v763
    %v988 = vpack.c.b16 %v772, %v768
    %v989 = vpack.c.b16 %v773, %v769
    %v990 = vpack.c.b16 %v774, %v770
    %v991 = vpack.c.b16 %v775, %v771
    %v992 = vpack.c.b16 %v780, %v776
    %v993 = vpack.c.b16 %v781, %v777
    %v994 = vpack.c.b16 %v782, %v778
    %v995 = vpack.c.b16 %v783, %v779
    %v996 = vpack.c.b16 %v788, %v784
    %v997 = vpack.c.b16 %v789, %v785
    %v998 = vpack.c.b16 %v790, %v786
    %v999 = vpack.c.b16 %v791, %v787
    %v1000 = vpack.c.b16 %v796, %v792
    %v1001 = vpack.c.b16 %v797, %v793
    %v1002 = vpack.c.b16 %v798, %v794
    %v1003 = vpack.c.b16 %v799, %v795
    %v1004 = vpack.c.b16 %v804, %v800
    %v1005 = vpack.c.b16 %v805, %v801
    %v1006 = vpack.c.b16 %v806, %v802
    %v1007 = vpack.c.b16 %v807, %v803
    %v1008 = vpack.c.b16 %v812, %v808
    %v1009 = vpack.c.b16 %v813, %v809
    %v1010 = vpack.c.b16 %v814, %v810
    %v1011 = vpack.c.b16 %v815, %v811
    %v1012 = vpack.c.b16 %v820, %v816
    %v1013 = vpack.c.b16 %v821, %v817
    %v1014 = vpack.c.b16 %v822, %v818
    %v1015 = vpack.c.b16 %v823, %v819
    %v1016 = vpack.c.b16 %v828, %v824
    %v1017 = vpack.c.b16 %v829, %v825
    %v1018 = vpack.c.b16 %v830, %v826
    %v1019 = vpack.c.b16 %v831, %v827
    %v1020 = vpack.c.b16 %v836, %v832
    %v1021 = vpack.c.b16 %v837, %v833
    %v1022 = vpack.c.b16 %v838, %v834
    %v1023 = vpack.c.b16 %v839, %v835
    %v1024 = vpack.c.b16 %v844, %v840
    %v1025 = vpack.c.b16 %v845, %v841
    %v1026 = vpack.c.b16 %v846, %v842
    %v1027 = vpack.c.b16 %v847, %v843
    %v1028 = vpack.c.b16 %v852, %v848
    %v1029 = vpack.c.b16 %v853, %v849
    %v1030 = vpack.c.b16 %v854, %v850
    %v1031 = vpack.c.b16 %v855, %v851
    %v1032 = vpack.c.b16 %v860, %v856
    %v1033 = vpack.c.b16 %v861, %v857
    %v1034 = vpack.c.b16 %v862, %v858
    %v1035 = vpack.c.b16 %v863, %v859
    %v1036 = vpack.c.b16 %v868, %v864
    %v1037 = vpack.c.b16 %v869, %v865
    %v1038 = vpack.c.b16 %v870, %v866
    %v1039 = vpack.c.b16 %v871, %v867
    %v1040 = vpack.c.b16 %v876, %v872
    %v1041 = vpack.c.b16 %v877, %v873
    %v1042 = vpack.c.b16 %v878, %v874
    %v1043 = vpack.c.b16 %v879, %v875
    %v1044 = vpack.c.b16 %v884, %v880
    %v1045 = vpack.c.b16 %v885, %v881
    %v1046 = vpack.c.b16 %v886, %v882
    %v1047 = vpack.c.b16 %v887, %v883
    %v1048 = vpack.c.b16 %v892, %v888
    %v1049 = vpack.c.b16 %v893, %v889
    %v1050 = vpack.c.b16 %v894, %v890
    %v1051 = vpack.c.b16 %v895, %v891
    %v1052 = vpack.c.b16 %v900, %v896
    %v1053 = vpack.c.b16 %v901, %v897
    %v1054 = vpack.c.b16 %v902, %v898
    %v1055 = vpack.c.b16 %v903, %v899
    %v1056 = vpack.c.b16 %v908, %v904
    %v1057 = vpack.c.b16 %v909, %v905
    %v1058 = vpack.c.b16 %v910, %v906
    %v1059 = vpack.c.b16 %v911, %v907
    %v1060 = vpack.c.b16 %v916, %v912
    %v1061 = vpack.c.b16 %v917, %v913
    %v1062 = vpack.c.b16 %v918, %v914
    %v1063 = vpack.c.b16 %v919, %v915
    %v1064 = vpack.c.b16 %v924, %v920
    %v1065 = vpack.c.b16 %v925, %v921
    %v1066 = vpack.c.b16 %v926, %v922
    %v1067 = vpack.c.b16 %v927, %v923
    %v1068 = vpack.c.b16 %v932, %v928
    %v1069 = vpack.c.b16 %v933, %v929
    %v1070 = vpack.c.b16 %v934, %v930
    %v1071 = vpack.c.b16 %v935, %v931
    %v1072 = vpack.c.b16 %v940, %v936
    %v1073 = vpack.c.b16 %v941, %v937
    %v1074 = vpack.c.b16 %v942, %v938
    %v1075 = vpack.c.b16 %v943, %v939
    %v1076 = vpack.c.b16 %v948, %v944
    %v1077 = vpack.c.b16 %v949, %v945
    %v1078 = vpack.c.b16 %v950, %v946
    %v1079 = vpack.c.b16 %v951, %v947
    %1208 = vmatprep.subr.bf16.mxu0 %v953
    %1209 = vmatpush1.bf16.msra.mxu0 %v952
    %1210 = vmatprep.subr.bf16.mxu0 %v957
    %1211 = vmatpush1.bf16.msra.mxu0 %v956
    %1212 = vmatprep.subr.bf16.mxu0 %v961
    %1213 = vmatpush1.bf16.msra.mxu0 %v960
    %1214 = vmatprep.subr.bf16.mxu0 %v965
    %1215 = vmatpush1.bf16.msra.mxu0 %v964
    %1216 = vmatprep.subr.bf16.mxu0 %v969
    %1217 = vmatpush1.bf16.msra.mxu0 %v968
    %1218 = vmatprep.subr.bf16.mxu0 %v973
    %1219 = vmatpush1.bf16.msra.mxu0 %v972
    %1220 = vmatprep.subr.bf16.mxu0 %v977
    %1221 = vmatpush1.bf16.msra.mxu0 %v976
    %1222 = vmatprep.subr.bf16.mxu0 %v981
    %1223 = vmatpush1.bf16.msra.mxu0 %v980
    %1224 = vmatprep.subr.bf16.mxu0 %v985
    %1225 = vmatpush1.bf16.msra.mxu0 %v984
    %1226 = vmatprep.subr.bf16.mxu0 %v989
    %1227 = vmatpush1.bf16.msra.mxu0 %v988
    %1228 = vmatprep.subr.bf16.mxu0 %v993
    %1229 = vmatpush1.bf16.msra.mxu0 %v992
    %1230 = vmatprep.subr.bf16.mxu0 %v997
    %1231 = vmatpush1.bf16.msra.mxu0 %v996
    %1232 = vmatprep.subr.bf16.mxu0 %v1001
    %1233 = vmatpush1.bf16.msra.mxu0 %v1000
    %1234 = vmatprep.subr.bf16.mxu0 %v1005
    %1235 = vmatpush1.bf16.msra.mxu0 %v1004
    %1236 = vmatprep.subr.bf16.mxu0 %v1009
    %1237 = vmatpush1.bf16.msra.mxu0 %v1008
    %1238 = vmatprep.subr.bf16.mxu0 %v1013
    %1239 = vmatpush1.bf16.msra.mxu0 %v1012
    %1240 = vmatprep.mubr.bf16.mxu0 %v437
    %1241 = vmatmul.mubr.bf16.gmra.mrb[0].mxu0 %v436
    %v1242 = vpop.f32.mrb[0].mxu0
    %v1243 = vadd.f32 0.0, %v1242
    %v1244 = vpop.f32.mrb[0].mxu0
    %v1245 = vadd.f32 0.0, %v1244
    %v1246 = vpop.f32.mrb[0].mxu0
    %v1247 = vadd.f32 0.0, %v1246
    %v1248 = vpop.f32.mrb[0].mxu0
    %v1249 = vadd.f32 0.0, %v1248
    %1250 = vdwg.mxu0
    %1251 = vmatprep.subr.bf16.mxu0 %v1017
    %1252 = vmatpush1.bf16.msra.mxu0 %v1016
    %1253 = vmatprep.subr.bf16.mxu0 %v1021
    %1254 = vmatpush1.bf16.msra.mxu0 %v1020
    %1255 = vmatprep.subr.bf16.mxu0 %v1025
    %1256 = vmatpush1.bf16.msra.mxu0 %v1024
    %1257 = vmatprep.subr.bf16.mxu0 %v1029
    %1258 = vmatpush1.bf16.msra.mxu0 %v1028
    %1259 = vmatprep.subr.bf16.mxu0 %v1033
    %1260 = vmatpush1.bf16.msra.mxu0 %v1032
    %1261 = vmatprep.subr.bf16.mxu0 %v1037
    %1262 = vmatpush1.bf16.msra.mxu0 %v1036
    %1263 = vmatprep.subr.bf16.mxu0 %v1041
    %1264 = vmatpush1.bf16.msra.mxu0 %v1040
    %1265 = vmatprep.subr.bf16.mxu0 %v1045
    %1266 = vmatpush1.bf16.msra.mxu0 %v1044
    %1267 = vmatprep.subr.bf16.mxu0 %v1049
    %1268 = vmatpush1.bf16.msra.mxu0 %v1048
    %1269 = vmatprep.subr.bf16.mxu0 %v1053
    %1270 = vmatpush1.bf16.msra.mxu0 %v1052
    %1271 = vmatprep.subr.bf16.mxu0 %v1057
    %1272 = vmatpush1.bf16.msra.mxu0 %v1056
    %1273 = vmatprep.subr.bf16.mxu0 %v1061
    %1274 = vmatpush1.bf16.msra.mxu0 %v1060
    %1275 = vmatprep.subr.bf16.mxu0 %v1065
    %1276 = vmatpush1.bf16.msra.mxu0 %v1064
    %1277 = vmatprep.subr.bf16.mxu0 %v1069
    %1278 = vmatpush1.bf16.msra.mxu0 %v1068
    %1279 = vmatprep.subr.bf16.mxu0 %v1073
    %1280 = vmatpush1.bf16.msra.mxu0 %v1072
    %1281 = vmatprep.subr.bf16.mxu0 %v1077
    %1282 = vmatpush1.bf16.msra.mxu0 %v1076
    %1283 = vmatprep.mubr.bf16.mxu0 %v439
    %1284 = vmatmul.mubr.bf16.gmra.mrb[0].mxu0 %v438
    %v1285 = vpop.f32.mrb[0].mxu0
    %v1286 = vadd.f32 %v1243, %v1285
    %v1287 = vpop.f32.mrb[0].mxu0
    %v1288 = vadd.f32 %v1245, %v1287
    %v1289 = vpop.f32.mrb[0].mxu0
    %v1290 = vadd.f32 %v1247, %v1289
    %v1291 = vpop.f32.mrb[0].mxu0
    %v1292 = vadd.f32 %v1249, %v1291
    %1293 = vdwg.mxu0
    %1294 = vmatprep.subr.bf16.mxu0 %v955
    %1295 = vmatpush1.bf16.msra.mxu0 %v954
    %1296 = vmatprep.subr.bf16.mxu0 %v959
    %1297 = vmatpush1.bf16.msra.mxu0 %v958
    %1298 = vmatprep.subr.bf16.mxu0 %v963
    %1299 = vmatpush1.bf16.msra.mxu0 %v962
    %1300 = vmatprep.subr.bf16.mxu0 %v967
    %1301 = vmatpush1.bf16.msra.mxu0 %v966
    %1302 = vmatprep.subr.bf16.mxu0 %v971
    %1303 = vmatpush1.bf16.msra.mxu0 %v970
    %1304 = vmatprep.subr.bf16.mxu0 %v975
    %1305 = vmatpush1.bf16.msra.mxu0 %v974
    %1306 = vmatprep.subr.bf16.mxu0 %v979
    %1307 = vmatpush1.bf16.msra.mxu0 %v978
    %1308 = vmatprep.subr.bf16.mxu0 %v983
    %1309 = vmatpush1.bf16.msra.mxu0 %v982
    %1310 = vmatprep.subr.bf16.mxu0 %v987
    %1311 = vmatpush1.bf16.msra.mxu0 %v986
    %1312 = vmatprep.subr.bf16.mxu0 %v991
    %1313 = vmatpush1.bf16.msra.mxu0 %v990
    %1314 = vmatprep.subr.bf16.mxu0 %v995
    %1315 = vmatpush1.bf16.msra.mxu0 %v994
    %1316 = vmatprep.subr.bf16.mxu0 %v999
    %1317 = vmatpush1.bf16.msra.mxu0 %v998
    %1318 = vmatprep.subr.bf16.mxu0 %v1003
    %1319 = vmatpush1.bf16.msra.mxu0 %v1002
    %1320 = vmatprep.subr.bf16.mxu0 %v1007
    %1321 = vmatpush1.bf16.msra.mxu0 %v1006
    %1322 = vmatprep.subr.bf16.mxu0 %v1011
    %1323 = vmatpush1.bf16.msra.mxu0 %v1010
    %1324 = vmatprep.subr.bf16.mxu0 %v1015
    %1325 = vmatpush1.bf16.msra.mxu0 %v1014
    %1326 = vmatprep.mubr.bf16.mxu0 %v437
    %1327 = vmatmul.mubr.bf16.gmra.mrb[0].mxu0 %v436
    %v1328 = vpop.f32.mrb[0].mxu0
    %v1329 = vadd.f32 0.0, %v1328
    %v1330 = vpop.f32.mrb[0].mxu0
    %v1331 = vadd.f32 0.0, %v1330
    %v1332 = vpop.f32.mrb[0].mxu0
    %v1333 = vadd.f32 0.0, %v1332
    %v1334 = vpop.f32.mrb[0].mxu0
    %v1335 = vadd.f32 0.0, %v1334
    %1336 = vdwg.mxu0
    %1337 = vmatprep.subr.bf16.mxu0 %v1019
    %1338 = vmatpush1.bf16.msra.mxu0 %v1018
    %1339 = vmatprep.subr.bf16.mxu0 %v1023
    %1340 = vmatpush1.bf16.msra.mxu0 %v1022
    %1341 = vmatprep.subr.bf16.mxu0 %v1027
    %1342 = vmatpush1.bf16.msra.mxu0 %v1026
    %1343 = vmatprep.subr.bf16.mxu0 %v1031
    %1344 = vmatpush1.bf16.msra.mxu0 %v1030
    %1345 = vmatprep.subr.bf16.mxu0 %v1035
    %1346 = vmatpush1.bf16.msra.mxu0 %v1034
    %1347 = vmatprep.subr.bf16.mxu0 %v1039
    %1348 = vmatpush1.bf16.msra.mxu0 %v1038
    %1349 = vmatprep.subr.bf16.mxu0 %v1043
    %1350 = vmatpush1.bf16.msra.mxu0 %v1042
    %1351 = vmatprep.subr.bf16.mxu0 %v1047
    %1352 = vmatpush1.bf16.msra.mxu0 %v1046
    %1353 = vmatprep.subr.bf16.mxu0 %v1051
    %1354 = vmatpush1.bf16.msra.mxu0 %v1050
    %1355 = vmatprep.subr.bf16.mxu0 %v1055
    %1356 = vmatpush1.bf16.msra.mxu0 %v1054
    %1357 = vmatprep.subr.bf16.mxu0 %v1059
    %1358 = vmatpush1.bf16.msra.mxu0 %v1058
    %1359 = vmatprep.subr.bf16.mxu0 %v1063
    %1360 = vmatpush1.bf16.msra.mxu0 %v1062
    %1361 = vmatprep.subr.bf16.mxu0 %v1067
    %1362 = vmatpush1.bf16.msra.mxu0 %v1066
    %1363 = vmatprep.subr.bf16.mxu0 %v1071
    %1364 = vmatpush1.bf16.msra.mxu0 %v1070
    %1365 = vmatprep.subr.bf16.mxu0 %v1075
    %1366 = vmatpush1.bf16.msra.mxu0 %v1074
    %1367 = vmatprep.subr.bf16.mxu0 %v1079
    %1368 = vmatpush1.bf16.msra.mxu0 %v1078
    %1369 = vmatprep.mubr.bf16.mxu0 %v439
    %1370 = vmatmul.mubr.bf16.gmra.mrb[0].mxu0 %v438
    %v1371 = vpop.f32.mrb[0].mxu0
    %v1372 = vadd.f32 %v1329, %v1371
    %v1373 = vpop.f32.mrb[0].mxu0
    %v1374 = vadd.f32 %v1331, %v1373
    %v1375 = vpop.f32.mrb[0].mxu0
    %v1376 = vadd.f32 %v1333, %v1375
    %v1377 = vpop.f32.mrb[0].mxu0
    %v1378 = vadd.f32 %v1335, %v1377
    %1379 = vdwg.mxu0
    %v1380 = vpack.c.bf16 %v1290, %v1286
    %v1381 = vpack.c.bf16 %v1292, %v1288
    %v1382 = vpack.c.bf16 %v1376, %v1372
    %v1383 = vpack.c.bf16 %v1378, %v1374
    %v1384 = vld [vmem:[%s4] sm:$0xf]
    %v1387 = vunpack.c.l.s4 1966171168
    %v1388 = vunpack.c.0.s8 %v1387
    %v1389 = vlaneseq
    %v1390 = vshrl.u32 %v1389, 7
    %v1391 = vsub.s32 %v1388, %v1390
    %v1392 = vrot.slane %v1384, %v1391
    %v1393 = vcombine.high %v1392, %v1392
    %v1395 = vunpack.c.l.s4 1966171168
    %v1396 = vunpack.c.0.s8 %v1395
    %v1397 = vlaneseq
    %v1398 = vshrl.u32 %v1397, 7
    %v1399 = vsub.s32 %v1396, %v1398
    %v1400 = vrot.slane %v1392, %v1399
    %v1402 = vunpack.c.l.s4 1966171168
    %v1403 = vunpack.c.0.s8 %v1402
    %v1404 = vlaneseq
    %v1405 = vshrl.u32 %v1404, 7
    %v1406 = vsub.s32 %v1403, %v1405
    %v1407 = vrot.slane %v1393, %v1406
    %v1408 = vcombine.high %v1400, %v1400
    %v1409 = vcombine.high %v1407, %v1407
    %v1411 = vpack.i.b16 %v1400, %v1400
    %v1413 = vlaneseq
    %v1414 = vshrl.u32 %v1413, 7
    %v1415 = vsub.s32 0, %v1414
    %v1416 = vrot.slane %v1411, %v1415
    %v1418 = vpack.i.b16 %v1407, %v1407
    %v1420 = vlaneseq
    %v1421 = vshrl.u32 %v1420, 7
    %v1422 = vsub.s32 0, %v1421
    %v1423 = vrot.slane %v1418, %v1422
    %v1425 = vpack.i.b16 %v1408, %v1408
    %v1427 = vlaneseq
    %v1428 = vshrl.u32 %v1427, 7
    %v1429 = vsub.s32 0, %v1428
    %v1430 = vrot.slane %v1425, %v1429
    %v1432 = vpack.i.b16 %v1409, %v1409
    %v1434 = vlaneseq
    %v1435 = vshrl.u32 %v1434, 7
    %v1436 = vsub.s32 0, %v1435
    %v1437 = vrot.slane %v1432, %v1436
    %v1438 = vadd.bf16 %v1380, %v1416
    %v1439 = vadd.bf16 %v1381, %v1423
    %v1440 = vadd.bf16 %v1382, %v1430
    %v1441 = vadd.bf16 %v1383, %v1437
    %v1442 = vmax.bf16 %v1438, 0
    %v1443 = vmax.bf16 %v1439, 0
    %v1444 = vmax.bf16 %v1440, 0
    %v1445 = vmax.bf16 %v1441, 0
    %v1446 = vld [vmem:[#allocation6] sm:$0xff]
    %v1447 = vld [vmem:[#allocation6 + $0x8] sm:$0xff]
    %v1448 = vld [vmem:[#allocation6 + $0x10] sm:$0xff]
    %v1449 = vld [vmem:[#allocation6 + $0x18] sm:$0xff]
    %v1450 = vld [vmem:[#allocation6 + $0x20] sm:$0xff]
    %v1451 = vld [vmem:[#allocation6 + $0x28] sm:$0xff]
    %v1452 = vld [vmem:[#allocation6 + $0x30] sm:$0xff]
    %v1453 = vld [vmem:[#allocation6 + $0x38] sm:$0xff]
    %v1454 = vld [vmem:[#allocation6 + $0x40] sm:$0xff]
    %v1455 = vld [vmem:[#allocation6 + $0x48] sm:$0xff]
    %v1456 = vld [vmem:[#allocation6 + $0x50] sm:$0xff]
    %v1457 = vld [vmem:[#allocation6 + $0x58] sm:$0xff]
    %v1458 = vld [vmem:[#allocation6 + $0x60] sm:$0xff]
    %v1459 = vld [vmem:[#allocation6 + $0x68] sm:$0xff]
    %v1460 = vld [vmem:[#allocation6 + $0x70] sm:$0xff]
    %v1461 = vld [vmem:[#allocation6 + $0x78] sm:$0xff]
    %v1462 = vld [vmem:[#allocation6 + $0x80] sm:$0xff]
    %v1463 = vld [vmem:[#allocation6 + $0x88] sm:$0xff]
    %v1464 = vld [vmem:[#allocation6 + $0x90] sm:$0xff]
    %v1465 = vld [vmem:[#allocation6 + $0x98] sm:$0xff]
    %v1466 = vld [vmem:[#allocation6 + $0xa0] sm:$0xff]
    %v1467 = vld [vmem:[#allocation6 + $0xa8] sm:$0xff]
    %v1468 = vld [vmem:[#allocation6 + $0xb0] sm:$0xff]
    %v1469 = vld [vmem:[#allocation6 + $0xb8] sm:$0xff]
    %v1470 = vld [vmem:[#allocation6 + $0xc0] sm:$0xff]
    %v1471 = vld [vmem:[#allocation6 + $0xc8] sm:$0xff]
    %v1472 = vld [vmem:[#allocation6 + $0xd0] sm:$0xff]
    %v1473 = vld [vmem:[#allocation6 + $0xd8] sm:$0xff]
    %v1474 = vld [vmem:[#allocation6 + $0xe0] sm:$0xff]
    %v1475 = vld [vmem:[#allocation6 + $0xe8] sm:$0xff]
    %v1476 = vld [vmem:[#allocation6 + $0xf0] sm:$0xff]
    %v1477 = vld [vmem:[#allocation6 + $0xf8] sm:$0xff]
    %v1478 = vld [vmem:[#allocation6 + $0x100] sm:$0xff]
    %v1479 = vld [vmem:[#allocation6 + $0x108] sm:$0xff]
    %v1480 = vld [vmem:[#allocation6 + $0x110] sm:$0xff]
    %v1481 = vld [vmem:[#allocation6 + $0x118] sm:$0xff]
    %v1482 = vld [vmem:[#allocation6 + $0x120] sm:$0xff]
    %v1483 = vld [vmem:[#allocation6 + $0x128] sm:$0xff]
    %v1484 = vld [vmem:[#allocation6 + $0x130] sm:$0xff]
    %v1485 = vld [vmem:[#allocation6 + $0x138] sm:$0xff]
    %v1486 = vld [vmem:[#allocation6 + $0x140] sm:$0xff]
    %v1487 = vld [vmem:[#allocation6 + $0x148] sm:$0xff]
    %v1488 = vld [vmem:[#allocation6 + $0x150] sm:$0xff]
    %v1489 = vld [vmem:[#allocation6 + $0x158] sm:$0xff]
    %v1490 = vld [vmem:[#allocation6 + $0x160] sm:$0xff]
    %v1491 = vld [vmem:[#allocation6 + $0x168] sm:$0xff]
    %v1492 = vld [vmem:[#allocation6 + $0x170] sm:$0xff]
    %v1493 = vld [vmem:[#allocation6 + $0x178] sm:$0xff]
    %v1494 = vld [vmem:[#allocation6 + $0x180] sm:$0xff]
    %v1495 = vld [vmem:[#allocation6 + $0x188] sm:$0xff]
    %v1496 = vld [vmem:[#allocation6 + $0x190] sm:$0xff]
    %v1497 = vld [vmem:[#allocation6 + $0x198] sm:$0xff]
    %v1498 = vld [vmem:[#allocation6 + $0x1a0] sm:$0xff]
    %v1499 = vld [vmem:[#allocation6 + $0x1a8] sm:$0xff]
    %v1500 = vld [vmem:[#allocation6 + $0x1b0] sm:$0xff]
    %v1501 = vld [vmem:[#allocation6 + $0x1b8] sm:$0xff]
    %v1502 = vld [vmem:[#allocation6 + $0x1c0] sm:$0xff]
    %v1503 = vld [vmem:[#allocation6 + $0x1c8] sm:$0xff]
    %v1504 = vld [vmem:[#allocation6 + $0x1d0] sm:$0xff]
    %v1505 = vld [vmem:[#allocation6 + $0x1d8] sm:$0xff]
    %v1506 = vld [vmem:[#allocation6 + $0x1e0] sm:$0xff]
    %v1507 = vld [vmem:[#allocation6 + $0x1e8] sm:$0xff]
    %v1508 = vld [vmem:[#allocation6 + $0x1f0] sm:$0xff]
    %v1509 = vld [vmem:[#allocation6 + $0x1f8] sm:$0xff]
    %v1510 = vld [vmem:[#allocation6 + $0x200] sm:$0xff]
    %v1511 = vld [vmem:[#allocation6 + $0x208] sm:$0xff]
    %v1512 = vld [vmem:[#allocation6 + $0x210] sm:$0xff]
    %v1513 = vld [vmem:[#allocation6 + $0x218] sm:$0xff]
    %v1514 = vld [vmem:[#allocation6 + $0x220] sm:$0xff]
    %v1515 = vld [vmem:[#allocation6 + $0x228] sm:$0xff]
    %v1516 = vld [vmem:[#allocation6 + $0x230] sm:$0xff]
    %v1517 = vld [vmem:[#allocation6 + $0x238] sm:$0xff]
    %v1518 = vld [vmem:[#allocation6 + $0x240] sm:$0xff]
    %v1519 = vld [vmem:[#allocation6 + $0x248] sm:$0xff]
    %v1520 = vld [vmem:[#allocation6 + $0x250] sm:$0xff]
    %v1521 = vld [vmem:[#allocation6 + $0x258] sm:$0xff]
    %v1522 = vld [vmem:[#allocation6 + $0x260] sm:$0xff]
    %v1523 = vld [vmem:[#allocation6 + $0x268] sm:$0xff]
    %v1524 = vld [vmem:[#allocation6 + $0x270] sm:$0xff]
    %v1525 = vld [vmem:[#allocation6 + $0x278] sm:$0xff]
    %v1526 = vld [vmem:[#allocation6 + $0x280] sm:$0xff]
    %v1527 = vld [vmem:[#allocation6 + $0x288] sm:$0xff]
    %v1528 = vld [vmem:[#allocation6 + $0x290] sm:$0xff]
    %v1529 = vld [vmem:[#allocation6 + $0x298] sm:$0xff]
    %v1530 = vld [vmem:[#allocation6 + $0x2a0] sm:$0xff]
    %v1531 = vld [vmem:[#allocation6 + $0x2a8] sm:$0xff]
    %v1532 = vld [vmem:[#allocation6 + $0x2b0] sm:$0xff]
    %v1533 = vld [vmem:[#allocation6 + $0x2b8] sm:$0xff]
    %v1534 = vld [vmem:[#allocation6 + $0x2c0] sm:$0xff]
    %v1535 = vld [vmem:[#allocation6 + $0x2c8] sm:$0xff]
    %v1536 = vld [vmem:[#allocation6 + $0x2d0] sm:$0xff]
    %v1537 = vld [vmem:[#allocation6 + $0x2d8] sm:$0xff]
    %v1538 = vld [vmem:[#allocation6 + $0x2e0] sm:$0xff]
    %v1539 = vld [vmem:[#allocation6 + $0x2e8] sm:$0xff]
    %v1540 = vld [vmem:[#allocation6 + $0x2f0] sm:$0xff]
    %v1541 = vld [vmem:[#allocation6 + $0x2f8] sm:$0xff]
    %v1542 = vld [vmem:[#allocation6 + $0x300] sm:$0xff]
    %v1543 = vld [vmem:[#allocation6 + $0x308] sm:$0xff]
    %v1544 = vld [vmem:[#allocation6 + $0x310] sm:$0xff]
    %v1545 = vld [vmem:[#allocation6 + $0x318] sm:$0xff]
    %v1546 = vld [vmem:[#allocation6 + $0x320] sm:$0xff]
    %v1547 = vld [vmem:[#allocation6 + $0x328] sm:$0xff]
    %v1548 = vld [vmem:[#allocation6 + $0x330] sm:$0xff]
    %v1549 = vld [vmem:[#allocation6 + $0x338] sm:$0xff]
    %v1550 = vld [vmem:[#allocation6 + $0x340] sm:$0xff]
    %v1551 = vld [vmem:[#allocation6 + $0x348] sm:$0xff]
    %v1552 = vld [vmem:[#allocation6 + $0x350] sm:$0xff]
    %v1553 = vld [vmem:[#allocation6 + $0x358] sm:$0xff]
    %v1554 = vld [vmem:[#allocation6 + $0x360] sm:$0xff]
    %v1555 = vld [vmem:[#allocation6 + $0x368] sm:$0xff]
    %v1556 = vld [vmem:[#allocation6 + $0x370] sm:$0xff]
    %v1557 = vld [vmem:[#allocation6 + $0x378] sm:$0xff]
    %v1558 = vld [vmem:[#allocation6 + $0x380] sm:$0xff]
    %v1559 = vld [vmem:[#allocation6 + $0x388] sm:$0xff]
    %v1560 = vld [vmem:[#allocation6 + $0x390] sm:$0xff]
    %v1561 = vld [vmem:[#allocation6 + $0x398] sm:$0xff]
    %v1562 = vld [vmem:[#allocation6 + $0x3a0] sm:$0xff]
    %v1563 = vld [vmem:[#allocation6 + $0x3a8] sm:$0xff]
    %v1564 = vld [vmem:[#allocation6 + $0x3b0] sm:$0xff]
    %v1565 = vld [vmem:[#allocation6 + $0x3b8] sm:$0xff]
    %v1566 = vld [vmem:[#allocation6 + $0x3c0] sm:$0xff]
    %v1567 = vld [vmem:[#allocation6 + $0x3c8] sm:$0xff]
    %v1568 = vld [vmem:[#allocation6 + $0x3d0] sm:$0xff]
    %v1569 = vld [vmem:[#allocation6 + $0x3d8] sm:$0xff]
    %v1570 = vld [vmem:[#allocation6 + $0x3e0] sm:$0xff]
    %v1571 = vld [vmem:[#allocation6 + $0x3e8] sm:$0xff]
    %v1572 = vld [vmem:[#allocation6 + $0x3f0] sm:$0xff]
    %v1573 = vld [vmem:[#allocation6 + $0x3f8] sm:$0xff]
    %v1702 = vunpack.c.l.b16 %v1446
    %v1703 = vunpack.c.h.b16 %v1446
    %v1704 = vunpack.c.l.b16 %v1447
    %v1705 = vunpack.c.h.b16 %v1447
    %v1706 = vunpack.c.l.b16 %v1448
    %v1707 = vunpack.c.h.b16 %v1448
    %v1708 = vunpack.c.l.b16 %v1449
    %v1709 = vunpack.c.h.b16 %v1449
    %v1710 = vunpack.c.l.b16 %v1450
    %v1711 = vunpack.c.h.b16 %v1450
    %v1712 = vunpack.c.l.b16 %v1451
    %v1713 = vunpack.c.h.b16 %v1451
    %v1714 = vunpack.c.l.b16 %v1452
    %v1715 = vunpack.c.h.b16 %v1452
    %v1716 = vunpack.c.l.b16 %v1453
    %v1717 = vunpack.c.h.b16 %v1453
    %v1718 = vunpack.c.l.b16 %v1454
    %v1719 = vunpack.c.h.b16 %v1454
    %v1720 = vunpack.c.l.b16 %v1455
    %v1721 = vunpack.c.h.b16 %v1455
    %v1722 = vunpack.c.l.b16 %v1456
    %v1723 = vunpack.c.h.b16 %v1456
    %v1724 = vunpack.c.l.b16 %v1457
    %v1725 = vunpack.c.h.b16 %v1457
    %v1726 = vunpack.c.l.b16 %v1458
    %v1727 = vunpack.c.h.b16 %v1458
    %v1728 = vunpack.c.l.b16 %v1459
    %v1729 = vunpack.c.h.b16 %v1459
    %v1730 = vunpack.c.l.b16 %v1460
    %v1731 = vunpack.c.h.b16 %v1460
    %v1732 = vunpack.c.l.b16 %v1461
    %v1733 = vunpack.c.h.b16 %v1461
    %v1734 = vunpack.c.l.b16 %v1462
    %v1735 = vunpack.c.h.b16 %v1462
    %v1736 = vunpack.c.l.b16 %v1463
    %v1737 = vunpack.c.h.b16 %v1463
    %v1738 = vunpack.c.l.b16 %v1464
    %v1739 = vunpack.c.h.b16 %v1464
    %v1740 = vunpack.c.l.b16 %v1465
    %v1741 = vunpack.c.h.b16 %v1465
    %v1742 = vunpack.c.l.b16 %v1466
    %v1743 = vunpack.c.h.b16 %v1466
    %v1744 = vunpack.c.l.b16 %v1467
    %v1745 = vunpack.c.h.b16 %v1467
    %v1746 = vunpack.c.l.b16 %v1468
    %v1747 = vunpack.c.h.b16 %v1468
    %v1748 = vunpack.c.l.b16 %v1469
    %v1749 = vunpack.c.h.b16 %v1469
    %v1750 = vunpack.c.l.b16 %v1470
    %v1751 = vunpack.c.h.b16 %v1470
    %v1752 = vunpack.c.l.b16 %v1471
    %v1753 = vunpack.c.h.b16 %v1471
    %v1754 = vunpack.c.l.b16 %v1472
    %v1755 = vunpack.c.h.b16 %v1472
    %v1756 = vunpack.c.l.b16 %v1473
    %v1757 = vunpack.c.h.b16 %v1473
    %v1758 = vunpack.c.l.b16 %v1474
    %v1759 = vunpack.c.h.b16 %v1474
    %v1760 = vunpack.c.l.b16 %v1475
    %v1761 = vunpack.c.h.b16 %v1475
    %v1762 = vunpack.c.l.b16 %v1476
    %v1763 = vunpack.c.h.b16 %v1476
    %v1764 = vunpack.c.l.b16 %v1477
    %v1765 = vunpack.c.h.b16 %v1477
    %v1766 = vunpack.c.l.b16 %v1478
    %v1767 = vunpack.c.h.b16 %v1478
    %v1768 = vunpack.c.l.b16 %v1479
    %v1769 = vunpack.c.h.b16 %v1479
    %v1770 = vunpack.c.l.b16 %v1480
    %v1771 = vunpack.c.h.b16 %v1480
    %v1772 = vunpack.c.l.b16 %v1481
    %v1773 = vunpack.c.h.b16 %v1481
    %v1774 = vunpack.c.l.b16 %v1482
    %v1775 = vunpack.c.h.b16 %v1482
    %v1776 = vunpack.c.l.b16 %v1483
    %v1777 = vunpack.c.h.b16 %v1483
    %v1778 = vunpack.c.l.b16 %v1484
    %v1779 = vunpack.c.h.b16 %v1484
    %v1780 = vunpack.c.l.b16 %v1485
    %v1781 = vunpack.c.h.b16 %v1485
    %v1782 = vunpack.c.l.b16 %v1486
    %v1783 = vunpack.c.h.b16 %v1486
    %v1784 = vunpack.c.l.b16 %v1487
    %v1785 = vunpack.c.h.b16 %v1487
    %v1786 = vunpack.c.l.b16 %v1488
    %v1787 = vunpack.c.h.b16 %v1488
    %v1788 = vunpack.c.l.b16 %v1489
    %v1789 = vunpack.c.h.b16 %v1489
    %v1790 = vunpack.c.l.b16 %v1490
    %v1791 = vunpack.c.h.b16 %v1490
    %v1792 = vunpack.c.l.b16 %v1491
    %v1793 = vunpack.c.h.b16 %v1491
    %v1794 = vunpack.c.l.b16 %v1492
    %v1795 = vunpack.c.h.b16 %v1492
    %v1796 = vunpack.c.l.b16 %v1493
    %v1797 = vunpack.c.h.b16 %v1493
    %v1798 = vunpack.c.l.b16 %v1494
    %v1799 = vunpack.c.h.b16 %v1494
    %v1800 = vunpack.c.l.b16 %v1495
    %v1801 = vunpack.c.h.b16 %v1495
    %v1802 = vunpack.c.l.b16 %v1496
    %v1803 = vunpack.c.h.b16 %v1496
    %v1804 = vunpack.c.l.b16 %v1497
    %v1805 = vunpack.c.h.b16 %v1497
    %v1806 = vunpack.c.l.b16 %v1498
    %v1807 = vunpack.c.h.b16 %v1498
    %v1808 = vunpack.c.l.b16 %v1499
    %v1809 = vunpack.c.h.b16 %v1499
    %v1810 = vunpack.c.l.b16 %v1500
    %v1811 = vunpack.c.h.b16 %v1500
    %v1812 = vunpack.c.l.b16 %v1501
    %v1813 = vunpack.c.h.b16 %v1501
    %v1814 = vunpack.c.l.b16 %v1502
    %v1815 = vunpack.c.h.b16 %v1502
    %v1816 = vunpack.c.l.b16 %v1503
    %v1817 = vunpack.c.h.b16 %v1503
    %v1818 = vunpack.c.l.b16 %v1504
    %v1819 = vunpack.c.h.b16 %v1504
    %v1820 = vunpack.c.l.b16 %v1505
    %v1821 = vunpack.c.h.b16 %v1505
    %v1822 = vunpack.c.l.b16 %v1506
    %v1823 = vunpack.c.h.b16 %v1506
    %v1824 = vunpack.c.l.b16 %v1507
    %v1825 = vunpack.c.h.b16 %v1507
    %v1826 = vunpack.c.l.b16 %v1508
    %v1827 = vunpack.c.h.b16 %v1508
    %v1828 = vunpack.c.l.b16 %v1509
    %v1829 = vunpack.c.h.b16 %v1509
    %v1830 = vunpack.c.l.b16 %v1510
    %v1831 = vunpack.c.h.b16 %v1510
    %v1832 = vunpack.c.l.b16 %v1511
    %v1833 = vunpack.c.h.b16 %v1511
    %v1834 = vunpack.c.l.b16 %v1512
    %v1835 = vunpack.c.h.b16 %v1512
    %v1836 = vunpack.c.l.b16 %v1513
    %v1837 = vunpack.c.h.b16 %v1513
    %v1838 = vunpack.c.l.b16 %v1514
    %v1839 = vunpack.c.h.b16 %v1514
    %v1840 = vunpack.c.l.b16 %v1515
    %v1841 = vunpack.c.h.b16 %v1515
    %v1842 = vunpack.c.l.b16 %v1516
    %v1843 = vunpack.c.h.b16 %v1516
    %v1844 = vunpack.c.l.b16 %v1517
    %v1845 = vunpack.c.h.b16 %v1517
    %v1846 = vunpack.c.l.b16 %v1518
    %v1847 = vunpack.c.h.b16 %v1518
    %v1848 = vunpack.c.l.b16 %v1519
    %v1849 = vunpack.c.h.b16 %v1519
    %v1850 = vunpack.c.l.b16 %v1520
    %v1851 = vunpack.c.h.b16 %v1520
    %v1852 = vunpack.c.l.b16 %v1521
    %v1853 = vunpack.c.h.b16 %v1521
    %v1854 = vunpack.c.l.b16 %v1522
    %v1855 = vunpack.c.h.b16 %v1522
    %v1856 = vunpack.c.l.b16 %v1523
    %v1857 = vunpack.c.h.b16 %v1523
    %v1858 = vunpack.c.l.b16 %v1524
    %v1859 = vunpack.c.h.b16 %v1524
    %v1860 = vunpack.c.l.b16 %v1525
    %v1861 = vunpack.c.h.b16 %v1525
    %v1862 = vunpack.c.l.b16 %v1526
    %v1863 = vunpack.c.h.b16 %v1526
    %v1864 = vunpack.c.l.b16 %v1527
    %v1865 = vunpack.c.h.b16 %v1527
    %v1866 = vunpack.c.l.b16 %v1528
    %v1867 = vunpack.c.h.b16 %v1528
    %v1868 = vunpack.c.l.b16 %v1529
    %v1869 = vunpack.c.h.b16 %v1529
    %v1870 = vunpack.c.l.b16 %v1530
    %v1871 = vunpack.c.h.b16 %v1530
    %v1872 = vunpack.c.l.b16 %v1531
    %v1873 = vunpack.c.h.b16 %v1531
    %v1874 = vunpack.c.l.b16 %v1532
    %v1875 = vunpack.c.h.b16 %v1532
    %v1876 = vunpack.c.l.b16 %v1533
    %v1877 = vunpack.c.h.b16 %v1533
    %v1878 = vunpack.c.l.b16 %v1534
    %v1879 = vunpack.c.h.b16 %v1534
    %v1880 = vunpack.c.l.b16 %v1535
    %v1881 = vunpack.c.h.b16 %v1535
    %v1882 = vunpack.c.l.b16 %v1536
    %v1883 = vunpack.c.h.b16 %v1536
    %v1884 = vunpack.c.l.b16 %v1537
    %v1885 = vunpack.c.h.b16 %v1537
    %v1886 = vunpack.c.l.b16 %v1538
    %v1887 = vunpack.c.h.b16 %v1538
    %v1888 = vunpack.c.l.b16 %v1539
    %v1889 = vunpack.c.h.b16 %v1539
    %v1890 = vunpack.c.l.b16 %v1540
    %v1891 = vunpack.c.h.b16 %v1540
    %v1892 = vunpack.c.l.b16 %v1541
    %v1893 = vunpack.c.h.b16 %v1541
    %v1894 = vunpack.c.l.b16 %v1542
    %v1895 = vunpack.c.h.b16 %v1542
    %v1896 = vunpack.c.l.b16 %v1543
    %v1897 = vunpack.c.h.b16 %v1543
    %v1898 = vunpack.c.l.b16 %v1544
    %v1899 = vunpack.c.h.b16 %v1544
    %v1900 = vunpack.c.l.b16 %v1545
    %v1901 = vunpack.c.h.b16 %v1545
    %v1902 = vunpack.c.l.b16 %v1546
    %v1903 = vunpack.c.h.b16 %v1546
    %v1904 = vunpack.c.l.b16 %v1547
    %v1905 = vunpack.c.h.b16 %v1547
    %v1906 = vunpack.c.l.b16 %v1548
    %v1907 = vunpack.c.h.b16 %v1548
    %v1908 = vunpack.c.l.b16 %v1549
    %v1909 = vunpack.c.h.b16 %v1549
    %v1910 = vunpack.c.l.b16 %v1550
    %v1911 = vunpack.c.h.b16 %v1550
    %v1912 = vunpack.c.l.b16 %v1551
    %v1913 = vunpack.c.h.b16 %v1551
    %v1914 = vunpack.c.l.b16 %v1552
    %v1915 = vunpack.c.h.b16 %v1552
    %v1916 = vunpack.c.l.b16 %v1553
    %v1917 = vunpack.c.h.b16 %v1553
    %v1918 = vunpack.c.l.b16 %v1554
    %v1919 = vunpack.c.h.b16 %v1554
    %v1920 = vunpack.c.l.b16 %v1555
    %v1921 = vunpack.c.h.b16 %v1555
    %v1922 = vunpack.c.l.b16 %v1556
    %v1923 = vunpack.c.h.b16 %v1556
    %v1924 = vunpack.c.l.b16 %v1557
    %v1925 = vunpack.c.h.b16 %v1557
    %v1926 = vunpack.c.l.b16 %v1558
    %v1927 = vunpack.c.h.b16 %v1558
    %v1928 = vunpack.c.l.b16 %v1559
    %v1929 = vunpack.c.h.b16 %v1559
    %v1930 = vunpack.c.l.b16 %v1560
    %v1931 = vunpack.c.h.b16 %v1560
    %v1932 = vunpack.c.l.b16 %v1561
    %v1933 = vunpack.c.h.b16 %v1561
    %v1934 = vunpack.c.l.b16 %v1562
    %v1935 = vunpack.c.h.b16 %v1562
    %v1936 = vunpack.c.l.b16 %v1563
    %v1937 = vunpack.c.h.b16 %v1563
    %v1938 = vunpack.c.l.b16 %v1564
    %v1939 = vunpack.c.h.b16 %v1564
    %v1940 = vunpack.c.l.b16 %v1565
    %v1941 = vunpack.c.h.b16 %v1565
    %v1942 = vunpack.c.l.b16 %v1566
    %v1943 = vunpack.c.h.b16 %v1566
    %v1944 = vunpack.c.l.b16 %v1567
    %v1945 = vunpack.c.h.b16 %v1567
    %v1946 = vunpack.c.l.b16 %v1568
    %v1947 = vunpack.c.h.b16 %v1568
    %v1948 = vunpack.c.l.b16 %v1569
    %v1949 = vunpack.c.h.b16 %v1569
    %v1950 = vunpack.c.l.b16 %v1570
    %v1951 = vunpack.c.h.b16 %v1570
    %v1952 = vunpack.c.l.b16 %v1571
    %v1953 = vunpack.c.h.b16 %v1571
    %v1954 = vunpack.c.l.b16 %v1572
    %v1955 = vunpack.c.h.b16 %v1572
    %v1956 = vunpack.c.l.b16 %v1573
    %v1957 = vunpack.c.h.b16 %v1573
    %v1958 = vpack.c.b16 %v1706, %v1702
    %v1959 = vpack.c.b16 %v1707, %v1703
    %v1960 = vpack.c.b16 %v1708, %v1704
    %v1961 = vpack.c.b16 %v1709, %v1705
    %v1962 = vpack.c.b16 %v1714, %v1710
    %v1963 = vpack.c.b16 %v1715, %v1711
    %v1964 = vpack.c.b16 %v1716, %v1712
    %v1965 = vpack.c.b16 %v1717, %v1713
    %v1966 = vpack.c.b16 %v1722, %v1718
    %v1967 = vpack.c.b16 %v1723, %v1719
    %v1968 = vpack.c.b16 %v1724, %v1720
    %v1969 = vpack.c.b16 %v1725, %v1721
    %v1970 = vpack.c.b16 %v1730, %v1726
    %v1971 = vpack.c.b16 %v1731, %v1727
    %v1972 = vpack.c.b16 %v1732, %v1728
    %v1973 = vpack.c.b16 %v1733, %v1729
    %v1974 = vpack.c.b16 %v1738, %v1734
    %v1975 = vpack.c.b16 %v1739, %v1735
    %v1976 = vpack.c.b16 %v1740, %v1736
    %v1977 = vpack.c.b16 %v1741, %v1737
    %v1978 = vpack.c.b16 %v1746, %v1742
    %v1979 = vpack.c.b16 %v1747, %v1743
    %v1980 = vpack.c.b16 %v1748, %v1744
    %v1981 = vpack.c.b16 %v1749, %v1745
    %v1982 = vpack.c.b16 %v1754, %v1750
    %v1983 = vpack.c.b16 %v1755, %v1751
    %v1984 = vpack.c.b16 %v1756, %v1752
    %v1985 = vpack.c.b16 %v1757, %v1753
    %v1986 = vpack.c.b16 %v1762, %v1758
    %v1987 = vpack.c.b16 %v1763, %v1759
    %v1988 = vpack.c.b16 %v1764, %v1760
    %v1989 = vpack.c.b16 %v1765, %v1761
    %v1990 = vpack.c.b16 %v1770, %v1766
    %v1991 = vpack.c.b16 %v1771, %v1767
    %v1992 = vpack.c.b16 %v1772, %v1768
    %v1993 = vpack.c.b16 %v1773, %v1769
    %v1994 = vpack.c.b16 %v1778, %v1774
    %v1995 = vpack.c.b16 %v1779, %v1775
    %v1996 = vpack.c.b16 %v1780, %v1776
    %v1997 = vpack.c.b16 %v1781, %v1777
    %v1998 = vpack.c.b16 %v1786, %v1782
    %v1999 = vpack.c.b16 %v1787, %v1783
    %v2000 = vpack.c.b16 %v1788, %v1784
    %v2001 = vpack.c.b16 %v1789, %v1785
    %v2002 = vpack.c.b16 %v1794, %v1790
    %v2003 = vpack.c.b16 %v1795, %v1791
    %v2004 = vpack.c.b16 %v1796, %v1792
    %v2005 = vpack.c.b16 %v1797, %v1793
    %v2006 = vpack.c.b16 %v1802, %v1798
    %v2007 = vpack.c.b16 %v1803, %v1799
    %v2008 = vpack.c.b16 %v1804, %v1800
    %v2009 = vpack.c.b16 %v1805, %v1801
    %v2010 = vpack.c.b16 %v1810, %v1806
    %v2011 = vpack.c.b16 %v1811, %v1807
    %v2012 = vpack.c.b16 %v1812, %v1808
    %v2013 = vpack.c.b16 %v1813, %v1809
    %v2014 = vpack.c.b16 %v1818, %v1814
    %v2015 = vpack.c.b16 %v1819, %v1815
    %v2016 = vpack.c.b16 %v1820, %v1816
    %v2017 = vpack.c.b16 %v1821, %v1817
    %v2018 = vpack.c.b16 %v1826, %v1822
    %v2019 = vpack.c.b16 %v1827, %v1823
    %v2020 = vpack.c.b16 %v1828, %v1824
    %v2021 = vpack.c.b16 %v1829, %v1825
    %v2022 = vpack.c.b16 %v1834, %v1830
    %v2023 = vpack.c.b16 %v1835, %v1831
    %v2024 = vpack.c.b16 %v1836, %v1832
    %v2025 = vpack.c.b16 %v1837, %v1833
    %v2026 = vpack.c.b16 %v1842, %v1838
    %v2027 = vpack.c.b16 %v1843, %v1839
    %v2028 = vpack.c.b16 %v1844, %v1840
    %v2029 = vpack.c.b16 %v1845, %v1841
    %v2030 = vpack.c.b16 %v1850, %v1846
    %v2031 = vpack.c.b16 %v1851, %v1847
    %v2032 = vpack.c.b16 %v1852, %v1848
    %v2033 = vpack.c.b16 %v1853, %v1849
    %v2034 = vpack.c.b16 %v1858, %v1854
    %v2035 = vpack.c.b16 %v1859, %v1855
    %v2036 = vpack.c.b16 %v1860, %v1856
    %v2037 = vpack.c.b16 %v1861, %v1857
    %v2038 = vpack.c.b16 %v1866, %v1862
    %v2039 = vpack.c.b16 %v1867, %v1863
    %v2040 = vpack.c.b16 %v1868, %v1864
    %v2041 = vpack.c.b16 %v1869, %v1865
    %v2042 = vpack.c.b16 %v1874, %v1870
    %v2043 = vpack.c.b16 %v1875, %v1871
    %v2044 = vpack.c.b16 %v1876, %v1872
    %v2045 = vpack.c.b16 %v1877, %v1873
    %v2046 = vpack.c.b16 %v1882, %v1878
    %v2047 = vpack.c.b16 %v1883, %v1879
    %v2048 = vpack.c.b16 %v1884, %v1880
    %v2049 = vpack.c.b16 %v1885, %v1881
    %v2050 = vpack.c.b16 %v1890, %v1886
    %v2051 = vpack.c.b16 %v1891, %v1887
    %v2052 = vpack.c.b16 %v1892, %v1888
    %v2053 = vpack.c.b16 %v1893, %v1889
    %v2054 = vpack.c.b16 %v1898, %v1894
    %v2055 = vpack.c.b16 %v1899, %v1895
    %v2056 = vpack.c.b16 %v1900, %v1896
    %v2057 = vpack.c.b16 %v1901, %v1897
    %v2058 = vpack.c.b16 %v1906, %v1902
    %v2059 = vpack.c.b16 %v1907, %v1903
    %v2060 = vpack.c.b16 %v1908, %v1904
    %v2061 = vpack.c.b16 %v1909, %v1905
    %v2062 = vpack.c.b16 %v1914, %v1910
    %v2063 = vpack.c.b16 %v1915, %v1911
    %v2064 = vpack.c.b16 %v1916, %v1912
    %v2065 = vpack.c.b16 %v1917, %v1913
    %v2066 = vpack.c.b16 %v1922, %v1918
    %v2067 = vpack.c.b16 %v1923, %v1919
    %v2068 = vpack.c.b16 %v1924, %v1920
    %v2069 = vpack.c.b16 %v1925, %v1921
    %v2070 = vpack.c.b16 %v1930, %v1926
    %v2071 = vpack.c.b16 %v1931, %v1927
    %v2072 = vpack.c.b16 %v1932, %v1928
    %v2073 = vpack.c.b16 %v1933, %v1929
    %v2074 = vpack.c.b16 %v1938, %v1934
    %v2075 = vpack.c.b16 %v1939, %v1935
    %v2076 = vpack.c.b16 %v1940, %v1936
    %v2077 = vpack.c.b16 %v1941, %v1937
    %v2078 = vpack.c.b16 %v1946, %v1942
    %v2079 = vpack.c.b16 %v1947, %v1943
    %v2080 = vpack.c.b16 %v1948, %v1944
    %v2081 = vpack.c.b16 %v1949, %v1945
    %v2082 = vpack.c.b16 %v1954, %v1950
    %v2083 = vpack.c.b16 %v1955, %v1951
    %v2084 = vpack.c.b16 %v1956, %v1952
    %v2085 = vpack.c.b16 %v1957, %v1953
    %2214 = vmatprep.subr.bf16.mxu0 %v1959
    %2215 = vmatpush1.bf16.msra.mxu0 %v1958
    %2216 = vmatprep.subr.bf16.mxu0 %v1963
    %2217 = vmatpush1.bf16.msra.mxu0 %v1962
    %2218 = vmatprep.subr.bf16.mxu0 %v1967
    %2219 = vmatpush1.bf16.msra.mxu0 %v1966
    %2220 = vmatprep.subr.bf16.mxu0 %v1971
    %2221 = vmatpush1.bf16.msra.mxu0 %v1970
    %2222 = vmatprep.subr.bf16.mxu0 %v1975
    %2223 = vmatpush1.bf16.msra.mxu0 %v1974
    %2224 = vmatprep.subr.bf16.mxu0 %v1979
    %2225 = vmatpush1.bf16.msra.mxu0 %v1978
    %2226 = vmatprep.subr.bf16.mxu0 %v1983
    %2227 = vmatpush1.bf16.msra.mxu0 %v1982
    %2228 = vmatprep.subr.bf16.mxu0 %v1987
    %2229 = vmatpush1.bf16.msra.mxu0 %v1986
    %2230 = vmatprep.subr.bf16.mxu0 %v1991
    %2231 = vmatpush1.bf16.msra.mxu0 %v1990
    %2232 = vmatprep.subr.bf16.mxu0 %v1995
    %2233 = vmatpush1.bf16.msra.mxu0 %v1994
    %2234 = vmatprep.subr.bf16.mxu0 %v1999
    %2235 = vmatpush1.bf16.msra.mxu0 %v1998
    %2236 = vmatprep.subr.bf16.mxu0 %v2003
    %2237 = vmatpush1.bf16.msra.mxu0 %v2002
    %2238 = vmatprep.subr.bf16.mxu0 %v2007
    %2239 = vmatpush1.bf16.msra.mxu0 %v2006
    %2240 = vmatprep.subr.bf16.mxu0 %v2011
    %2241 = vmatpush1.bf16.msra.mxu0 %v2010
    %2242 = vmatprep.subr.bf16.mxu0 %v2015
    %2243 = vmatpush1.bf16.msra.mxu0 %v2014
    %2244 = vmatprep.subr.bf16.mxu0 %v2019
    %2245 = vmatpush1.bf16.msra.mxu0 %v2018
    %2246 = vmatprep.mubr.bf16.mxu0 %v1443
    %2247 = vmatmul.mubr.bf16.gmra.mrb[0].mxu0 %v1442
    %v2248 = vpop.f32.mrb[0].mxu0
    %v2249 = vadd.f32 0.0, %v2248
    %v2250 = vpop.f32.mrb[0].mxu0
    %v2251 = vadd.f32 0.0, %v2250
    %v2252 = vpop.f32.mrb[0].mxu0
    %v2253 = vadd.f32 0.0, %v2252
    %v2254 = vpop.f32.mrb[0].mxu0
    %v2255 = vadd.f32 0.0, %v2254
    %2256 = vdwg.mxu0
    %2257 = vmatprep.subr.bf16.mxu0 %v2023
    %2258 = vmatpush1.bf16.msra.mxu0 %v2022
    %2259 = vmatprep.subr.bf16.mxu0 %v2027
    %2260 = vmatpush1.bf16.msra.mxu0 %v2026
    %2261 = vmatprep.subr.bf16.mxu0 %v2031
    %2262 = vmatpush1.bf16.msra.mxu0 %v2030
    %2263 = vmatprep.subr.bf16.mxu0 %v2035
    %2264 = vmatpush1.bf16.msra.mxu0 %v2034
    %2265 = vmatprep.subr.bf16.mxu0 %v2039
    %2266 = vmatpush1.bf16.msra.mxu0 %v2038
    %2267 = vmatprep.subr.bf16.mxu0 %v2043
    %2268 = vmatpush1.bf16.msra.mxu0 %v2042
    %2269 = vmatprep.subr.bf16.mxu0 %v2047
    %2270 = vmatpush1.bf16.msra.mxu0 %v2046
    %2271 = vmatprep.subr.bf16.mxu0 %v2051
    %2272 = vmatpush1.bf16.msra.mxu0 %v2050
    %2273 = vmatprep.subr.bf16.mxu0 %v2055
    %2274 = vmatpush1.bf16.msra.mxu0 %v2054
    %2275 = vmatprep.subr.bf16.mxu0 %v2059
    %2276 = vmatpush1.bf16.msra.mxu0 %v2058
    %2277 = vmatprep.subr.bf16.mxu0 %v2063
    %2278 = vmatpush1.bf16.msra.mxu0 %v2062
    %2279 = vmatprep.subr.bf16.mxu0 %v2067
    %2280 = vmatpush1.bf16.msra.mxu0 %v2066
    %2281 = vmatprep.subr.bf16.mxu0 %v2071
    %2282 = vmatpush1.bf16.msra.mxu0 %v2070
    %2283 = vmatprep.subr.bf16.mxu0 %v2075
    %2284 = vmatpush1.bf16.msra.mxu0 %v2074
    %2285 = vmatprep.subr.bf16.mxu0 %v2079
    %2286 = vmatpush1.bf16.msra.mxu0 %v2078
    %2287 = vmatprep.subr.bf16.mxu0 %v2083
    %2288 = vmatpush1.bf16.msra.mxu0 %v2082
    %2289 = vmatprep.mubr.bf16.mxu0 %v1445
    %2290 = vmatmul.mubr.bf16.gmra.mrb[0].mxu0 %v1444
    %v2291 = vpop.f32.mrb[0].mxu0
    %v2292 = vadd.f32 %v2249, %v2291
    %v2293 = vpop.f32.mrb[0].mxu0
    %v2294 = vadd.f32 %v2251, %v2293
    %v2295 = vpop.f32.mrb[0].mxu0
    %v2296 = vadd.f32 %v2253, %v2295
    %v2297 = vpop.f32.mrb[0].mxu0
    %v2298 = vadd.f32 %v2255, %v2297
    %2299 = vdwg.mxu0
    %2300 = vmatprep.subr.bf16.mxu0 %v1961
    %2301 = vmatpush1.bf16.msra.mxu0 %v1960
    %2302 = vmatprep.subr.bf16.mxu0 %v1965
    %2303 = vmatpush1.bf16.msra.mxu0 %v1964
    %2304 = vmatprep.subr.bf16.mxu0 %v1969
    %2305 = vmatpush1.bf16.msra.mxu0 %v1968
    %2306 = vmatprep.subr.bf16.mxu0 %v1973
    %2307 = vmatpush1.bf16.msra.mxu0 %v1972
    %2308 = vmatprep.subr.bf16.mxu0 %v1977
    %2309 = vmatpush1.bf16.msra.mxu0 %v1976
    %2310 = vmatprep.subr.bf16.mxu0 %v1981
    %2311 = vmatpush1.bf16.msra.mxu0 %v1980
    %2312 = vmatprep.subr.bf16.mxu0 %v1985
    %2313 = vmatpush1.bf16.msra.mxu0 %v1984
    %2314 = vmatprep.subr.bf16.mxu0 %v1989
    %2315 = vmatpush1.bf16.msra.mxu0 %v1988
    %2316 = vmatprep.subr.bf16.mxu0 %v1993
    %2317 = vmatpush1.bf16.msra.mxu0 %v1992
    %2318 = vmatprep.subr.bf16.mxu0 %v1997
    %2319 = vmatpush1.bf16.msra.mxu0 %v1996
    %2320 = vmatprep.subr.bf16.mxu0 %v2001
    %2321 = vmatpush1.bf16.msra.mxu0 %v2000
    %2322 = vmatprep.subr.bf16.mxu0 %v2005
    %2323 = vmatpush1.bf16.msra.mxu0 %v2004
    %2324 = vmatprep.subr.bf16.mxu0 %v2009
    %2325 = vmatpush1.bf16.msra.mxu0 %v2008
    %2326 = vmatprep.subr.bf16.mxu0 %v2013
    %2327 = vmatpush1.bf16.msra.mxu0 %v2012
    %2328 = vmatprep.subr.bf16.mxu0 %v2017
    %2329 = vmatpush1.bf16.msra.mxu0 %v2016
    %2330 = vmatprep.subr.bf16.mxu0 %v2021
    %2331 = vmatpush1.bf16.msra.mxu0 %v2020
    %2332 = vmatprep.mubr.bf16.mxu0 %v1443
    %2333 = vmatmul.mubr.bf16.gmra.mrb[0].mxu0 %v1442
    %v2334 = vpop.f32.mrb[0].mxu0
    %v2335 = vadd.f32 0.0, %v2334
    %v2336 = vpop.f32.mrb[0].mxu0
    %v2337 = vadd.f32 0.0, %v2336
    %v2338 = vpop.f32.mrb[0].mxu0
    %v2339 = vadd.f32 0.0, %v2338
    %v2340 = vpop.f32.mrb[0].mxu0
    %v2341 = vadd.f32 0.0, %v2340
    %2342 = vdwg.mxu0
    %2343 = vmatprep.subr.bf16.mxu0 %v2025
    %2344 = vmatpush1.bf16.msra.mxu0 %v2024
    %2345 = vmatprep.subr.bf16.mxu0 %v2029
    %2346 = vmatpush1.bf16.msra.mxu0 %v2028
    %2347 = vmatprep.subr.bf16.mxu0 %v2033
    %2348 = vmatpush1.bf16.msra.mxu0 %v2032
    %2349 = vmatprep.subr.bf16.mxu0 %v2037
    %2350 = vmatpush1.bf16.msra.mxu0 %v2036
    %2351 = vmatprep.subr.bf16.mxu0 %v2041
    %2352 = vmatpush1.bf16.msra.mxu0 %v2040
    %2353 = vmatprep.subr.bf16.mxu0 %v2045
    %2354 = vmatpush1.bf16.msra.mxu0 %v2044
    %2355 = vmatprep.subr.bf16.mxu0 %v2049
    %2356 = vmatpush1.bf16.msra.mxu0 %v2048
    %2357 = vmatprep.subr.bf16.mxu0 %v2053
    %2358 = vmatpush1.bf16.msra.mxu0 %v2052
    %2359 = vmatprep.subr.bf16.mxu0 %v2057
    %2360 = vmatpush1.bf16.msra.mxu0 %v2056
    %2361 = vmatprep.subr.bf16.mxu0 %v2061
    %2362 = vmatpush1.bf16.msra.mxu0 %v2060
    %2363 = vmatprep.subr.bf16.mxu0 %v2065
    %2364 = vmatpush1.bf16.msra.mxu0 %v2064
    %2365 = vmatprep.subr.bf16.mxu0 %v2069
    %2366 = vmatpush1.bf16.msra.mxu0 %v2068
    %2367 = vmatprep.subr.bf16.mxu0 %v2073
    %2368 = vmatpush1.bf16.msra.mxu0 %v2072
    %2369 = vmatprep.subr.bf16.mxu0 %v2077
    %2370 = vmatpush1.bf16.msra.mxu0 %v2076
    %2371 = vmatprep.subr.bf16.mxu0 %v2081
    %2372 = vmatpush1.bf16.msra.mxu0 %v2080
    %2373 = vmatprep.subr.bf16.mxu0 %v2085
    %2374 = vmatpush1.bf16.msra.mxu0 %v2084
    %2375 = vmatprep.mubr.bf16.mxu0 %v1445
    %2376 = vmatmul.mubr.bf16.gmra.mrb[0].mxu0 %v1444
    %v2377 = vpop.f32.mrb[0].mxu0
    %v2378 = vadd.f32 %v2335, %v2377
    %v2379 = vpop.f32.mrb[0].mxu0
    %v2380 = vadd.f32 %v2337, %v2379
    %v2381 = vpop.f32.mrb[0].mxu0
    %v2382 = vadd.f32 %v2339, %v2381
    %v2383 = vpop.f32.mrb[0].mxu0
    %v2384 = vadd.f32 %v2341, %v2383
    %2385 = vdwg.mxu0
    %v2386 = vpack.c.bf16 %v2296, %v2292
    %v2387 = vpack.c.bf16 %v2298, %v2294
    %v2388 = vpack.c.bf16 %v2382, %v2378
    %v2389 = vpack.c.bf16 %v2384, %v2380
    %v2390 = vld [vmem:[%s6] sm:$0xf]
    %v2393 = vunpack.c.l.s4 1966171168
    %v2394 = vunpack.c.0.s8 %v2393
    %v2395 = vlaneseq
    %v2396 = vshrl.u32 %v2395, 7
    %v2397 = vsub.s32 %v2394, %v2396
    %v2398 = vrot.slane %v2390, %v2397
    %v2399 = vcombine.high %v2398, %v2398
    %v2401 = vunpack.c.l.s4 1966171168
    %v2402 = vunpack.c.0.s8 %v2401
    %v2403 = vlaneseq
    %v2404 = vshrl.u32 %v2403, 7
    %v2405 = vsub.s32 %v2402, %v2404
    %v2406 = vrot.slane %v2398, %v2405
    %v2408 = vunpack.c.l.s4 1966171168
    %v2409 = vunpack.c.0.s8 %v2408
    %v2410 = vlaneseq
    %v2411 = vshrl.u32 %v2410, 7
    %v2412 = vsub.s32 %v2409, %v2411
    %v2413 = vrot.slane %v2399, %v2412
    %v2414 = vcombine.high %v2406, %v2406
    %v2415 = vcombine.high %v2413, %v2413
    %v2417 = vpack.i.b16 %v2406, %v2406
    %v2419 = vlaneseq
    %v2420 = vshrl.u32 %v2419, 7
    %v2421 = vsub.s32 0, %v2420
    %v2422 = vrot.slane %v2417, %v2421
    %v2424 = vpack.i.b16 %v2413, %v2413
    %v2426 = vlaneseq
    %v2427 = vshrl.u32 %v2426, 7
    %v2428 = vsub.s32 0, %v2427
    %v2429 = vrot.slane %v2424, %v2428
    %v2431 = vpack.i.b16 %v2414, %v2414
    %v2433 = vlaneseq
    %v2434 = vshrl.u32 %v2433, 7
    %v2435 = vsub.s32 0, %v2434
    %v2436 = vrot.slane %v2431, %v2435
    %v2438 = vpack.i.b16 %v2415, %v2415
    %v2440 = vlaneseq
    %v2441 = vshrl.u32 %v2440, 7
    %v2442 = vsub.s32 0, %v2441
    %v2443 = vrot.slane %v2438, %v2442
    %v2444 = vadd.bf16 %v2386, %v2422
    %v2445 = vadd.bf16 %v2387, %v2429
    %v2446 = vadd.bf16 %v2388, %v2436
    %v2447 = vadd.bf16 %v2389, %v2443
    %v2448 = vmax.bf16 %v2444, 0
    %v2449 = vmax.bf16 %v2445, 0
    %v2450 = vmax.bf16 %v2446, 0
    %v2451 = vmax.bf16 %v2447, 0
    %v2452 = vld [vmem:[#allocation7] sm:$0xf]
    %v2453 = vld [vmem:[#allocation7 + $0x4] sm:$0xf]
    %v2454 = vld [vmem:[#allocation7 + $0x8] sm:$0xf]
    %v2455 = vld [vmem:[#allocation7 + $0xc] sm:$0xf]
    %v2456 = vld [vmem:[#allocation7 + $0x10] sm:$0xf]
    %v2457 = vld [vmem:[#allocation7 + $0x14] sm:$0xf]
    %v2458 = vld [vmem:[#allocation7 + $0x18] sm:$0xf]
    %v2459 = vld [vmem:[#allocation7 + $0x1c] sm:$0xf]
    %v2460 = vld [vmem:[#allocation7 + $0x20] sm:$0xf]
    %v2461 = vld [vmem:[#allocation7 + $0x24] sm:$0xf]
    %v2462 = vld [vmem:[#allocation7 + $0x28] sm:$0xf]
    %v2463 = vld [vmem:[#allocation7 + $0x2c] sm:$0xf]
    %v2464 = vld [vmem:[#allocation7 + $0x30] sm:$0xf]
    %v2465 = vld [vmem:[#allocation7 + $0x34] sm:$0xf]
    %v2466 = vld [vmem:[#allocation7 + $0x38] sm:$0xf]
    %v2467 = vld [vmem:[#allocation7 + $0x3c] sm:$0xf]
    %v2468 = vld [vmem:[#allocation7 + $0x40] sm:$0xf]
    %v2469 = vld [vmem:[#allocation7 + $0x44] sm:$0xf]
    %v2470 = vld [vmem:[#allocation7 + $0x48] sm:$0xf]
    %v2471 = vld [vmem:[#allocation7 + $0x4c] sm:$0xf]
    %v2472 = vld [vmem:[#allocation7 + $0x50] sm:$0xf]
    %v2473 = vld [vmem:[#allocation7 + $0x54] sm:$0xf]
    %v2474 = vld [vmem:[#allocation7 + $0x58] sm:$0xf]
    %v2475 = vld [vmem:[#allocation7 + $0x5c] sm:$0xf]
    %v2476 = vld [vmem:[#allocation7 + $0x60] sm:$0xf]
    %v2477 = vld [vmem:[#allocation7 + $0x64] sm:$0xf]
    %v2478 = vld [vmem:[#allocation7 + $0x68] sm:$0xf]
    %v2479 = vld [vmem:[#allocation7 + $0x6c] sm:$0xf]
    %v2480 = vld [vmem:[#allocation7 + $0x70] sm:$0xf]
    %v2481 = vld [vmem:[#allocation7 + $0x74] sm:$0xf]
    %v2482 = vld [vmem:[#allocation7 + $0x78] sm:$0xf]
    %v2483 = vld [vmem:[#allocation7 + $0x7c] sm:$0xf]
    %v2484 = vld [vmem:[#allocation7 + $0x80] sm:$0xf]
    %v2485 = vld [vmem:[#allocation7 + $0x84] sm:$0xf]
    %v2486 = vld [vmem:[#allocation7 + $0x88] sm:$0xf]
    %v2487 = vld [vmem:[#allocation7 + $0x8c] sm:$0xf]
    %v2488 = vld [vmem:[#allocation7 + $0x90] sm:$0xf]
    %v2489 = vld [vmem:[#allocation7 + $0x94] sm:$0xf]
    %v2490 = vld [vmem:[#allocation7 + $0x98] sm:$0xf]
    %v2491 = vld [vmem:[#allocation7 + $0x9c] sm:$0xf]
    %v2492 = vld [vmem:[#allocation7 + $0xa0] sm:$0xf]
    %v2493 = vld [vmem:[#allocation7 + $0xa4] sm:$0xf]
    %v2494 = vld [vmem:[#allocation7 + $0xa8] sm:$0xf]
    %v2495 = vld [vmem:[#allocation7 + $0xac] sm:$0xf]
    %v2496 = vld [vmem:[#allocation7 + $0xb0] sm:$0xf]
    %v2497 = vld [vmem:[#allocation7 + $0xb4] sm:$0xf]
    %v2498 = vld [vmem:[#allocation7 + $0xb8] sm:$0xf]
    %v2499 = vld [vmem:[#allocation7 + $0xbc] sm:$0xf]
    %v2500 = vld [vmem:[#allocation7 + $0xc0] sm:$0xf]
    %v2501 = vld [vmem:[#allocation7 + $0xc4] sm:$0xf]
    %v2502 = vld [vmem:[#allocation7 + $0xc8] sm:$0xf]
    %v2503 = vld [vmem:[#allocation7 + $0xcc] sm:$0xf]
    %v2504 = vld [vmem:[#allocation7 + $0xd0] sm:$0xf]
    %v2505 = vld [vmem:[#allocation7 + $0xd4] sm:$0xf]
    %v2506 = vld [vmem:[#allocation7 + $0xd8] sm:$0xf]
    %v2507 = vld [vmem:[#allocation7 + $0xdc] sm:$0xf]
    %v2508 = vld [vmem:[#allocation7 + $0xe0] sm:$0xf]
    %v2509 = vld [vmem:[#allocation7 + $0xe4] sm:$0xf]
    %v2510 = vld [vmem:[#allocation7 + $0xe8] sm:$0xf]
    %v2511 = vld [vmem:[#allocation7 + $0xec] sm:$0xf]
    %v2512 = vld [vmem:[#allocation7 + $0xf0] sm:$0xf]
    %v2513 = vld [vmem:[#allocation7 + $0xf4] sm:$0xf]
    %v2514 = vld [vmem:[#allocation7 + $0xf8] sm:$0xf]
    %v2515 = vld [vmem:[#allocation7 + $0xfc] sm:$0xf]
    %v2516 = vld [vmem:[%s8] sm:$0x1]
    %v2518 = vlaneseq
    %v2519 = vshrl.u32 %v2518, 7
    %v2520 = vsub.s32 0, %v2519
    %v2521 = vrot.slane %v2516, %v2520
    %v2587 = vunpack.c.l.b16 %v2452
    %v2588 = vunpack.c.l.b16 %v2453
    %v2589 = vunpack.c.l.b16 %v2454
    %v2590 = vunpack.c.l.b16 %v2455
    %v2591 = vunpack.c.l.b16 %v2456
    %v2592 = vunpack.c.l.b16 %v2457
    %v2593 = vunpack.c.l.b16 %v2458
    %v2594 = vunpack.c.l.b16 %v2459
    %v2595 = vunpack.c.l.b16 %v2460
    %v2596 = vunpack.c.l.b16 %v2461
    %v2597 = vunpack.c.l.b16 %v2462
    %v2598 = vunpack.c.l.b16 %v2463
    %v2599 = vunpack.c.l.b16 %v2464
    %v2600 = vunpack.c.l.b16 %v2465
    %v2601 = vunpack.c.l.b16 %v2466
    %v2602 = vunpack.c.l.b16 %v2467
    %v2603 = vunpack.c.l.b16 %v2468
    %v2604 = vunpack.c.l.b16 %v2469
    %v2605 = vunpack.c.l.b16 %v2470
    %v2606 = vunpack.c.l.b16 %v2471
    %v2607 = vunpack.c.l.b16 %v2472
    %v2608 = vunpack.c.l.b16 %v2473
    %v2609 = vunpack.c.l.b16 %v2474
    %v2610 = vunpack.c.l.b16 %v2475
    %v2611 = vunpack.c.l.b16 %v2476
    %v2612 = vunpack.c.l.b16 %v2477
    %v2613 = vunpack.c.l.b16 %v2478
    %v2614 = vunpack.c.l.b16 %v2479
    %v2615 = vunpack.c.l.b16 %v2480
    %v2616 = vunpack.c.l.b16 %v2481
    %v2617 = vunpack.c.l.b16 %v2482
    %v2618 = vunpack.c.l.b16 %v2483
    %v2619 = vunpack.c.l.b16 %v2484
    %v2620 = vunpack.c.l.b16 %v2485
    %v2621 = vunpack.c.l.b16 %v2486
    %v2622 = vunpack.c.l.b16 %v2487
    %v2623 = vunpack.c.l.b16 %v2488
    %v2624 = vunpack.c.l.b16 %v2489
    %v2625 = vunpack.c.l.b16 %v2490
    %v2626 = vunpack.c.l.b16 %v2491
    %v2627 = vunpack.c.l.b16 %v2492
    %v2628 = vunpack.c.l.b16 %v2493
    %v2629 = vunpack.c.l.b16 %v2494
    %v2630 = vunpack.c.l.b16 %v2495
    %v2631 = vunpack.c.l.b16 %v2496
    %v2632 = vunpack.c.l.b16 %v2497
    %v2633 = vunpack.c.l.b16 %v2498
    %v2634 = vunpack.c.l.b16 %v2499
    %v2635 = vunpack.c.l.b16 %v2500
    %v2636 = vunpack.c.l.b16 %v2501
    %v2637 = vunpack.c.l.b16 %v2502
    %v2638 = vunpack.c.l.b16 %v2503
    %v2639 = vunpack.c.l.b16 %v2504
    %v2640 = vunpack.c.l.b16 %v2505
    %v2641 = vunpack.c.l.b16 %v2506
    %v2642 = vunpack.c.l.b16 %v2507
    %v2643 = vunpack.c.l.b16 %v2508
    %v2644 = vunpack.c.l.b16 %v2509
    %v2645 = vunpack.c.l.b16 %v2510
    %v2646 = vunpack.c.l.b16 %v2511
    %v2647 = vunpack.c.l.b16 %v2512
    %v2648 = vunpack.c.l.b16 %v2513
    %v2649 = vunpack.c.l.b16 %v2514
    %v2650 = vunpack.c.l.b16 %v2515
    %v2651 = vpack.c.b16 %v2588, %v2587
    %v2652 = vpack.c.b16 %v2590, %v2589
    %v2653 = vpack.c.b16 %v2592, %v2591
    %v2654 = vpack.c.b16 %v2594, %v2593
    %v2655 = vpack.c.b16 %v2596, %v2595
    %v2656 = vpack.c.b16 %v2598, %v2597
    %v2657 = vpack.c.b16 %v2600, %v2599
    %v2658 = vpack.c.b16 %v2602, %v2601
    %v2659 = vpack.c.b16 %v2604, %v2603
    %v2660 = vpack.c.b16 %v2606, %v2605
    %v2661 = vpack.c.b16 %v2608, %v2607
    %v2662 = vpack.c.b16 %v2610, %v2609
    %v2663 = vpack.c.b16 %v2612, %v2611
    %v2664 = vpack.c.b16 %v2614, %v2613
    %v2665 = vpack.c.b16 %v2616, %v2615
    %v2666 = vpack.c.b16 %v2618, %v2617
    %v2667 = vpack.c.b16 %v2620, %v2619
    %v2668 = vpack.c.b16 %v2622, %v2621
    %v2669 = vpack.c.b16 %v2624, %v2623
    %v2670 = vpack.c.b16 %v2626, %v2625
    %v2671 = vpack.c.b16 %v2628, %v2627
    %v2672 = vpack.c.b16 %v2630, %v2629
    %v2673 = vpack.c.b16 %v2632, %v2631
    %v2674 = vpack.c.b16 %v2634, %v2633
    %v2675 = vpack.c.b16 %v2636, %v2635
    %v2676 = vpack.c.b16 %v2638, %v2637
    %v2677 = vpack.c.b16 %v2640, %v2639
    %v2678 = vpack.c.b16 %v2642, %v2641
    %v2679 = vpack.c.b16 %v2644, %v2643
    %v2680 = vpack.c.b16 %v2646, %v2645
    %v2681 = vpack.c.b16 %v2648, %v2647
    %v2682 = vpack.c.b16 %v2650, %v2649
    %2715 = vmatprep.subr.bf16.mxu0 0
    %2716 = vmatpush1.bf16.msra.mxu0 %v2651
    %2717 = vmatprep.subr.bf16.mxu0 0
    %2718 = vmatpush1.bf16.msra.mxu0 %v2652
    %2719 = vmatprep.subr.bf16.mxu0 0
    %2720 = vmatpush1.bf16.msra.mxu0 %v2653
    %2721 = vmatprep.subr.bf16.mxu0 0
    %2722 = vmatpush1.bf16.msra.mxu0 %v2654
    %2723 = vmatprep.subr.bf16.mxu0 0
    %2724 = vmatpush1.bf16.msra.mxu0 %v2655
    %2725 = vmatprep.subr.bf16.mxu0 0
    %2726 = vmatpush1.bf16.msra.mxu0 %v2656
    %2727 = vmatprep.subr.bf16.mxu0 0
    %2728 = vmatpush1.bf16.msra.mxu0 %v2657
    %2729 = vmatprep.subr.bf16.mxu0 0
    %2730 = vmatpush1.bf16.msra.mxu0 %v2658
    %2731 = vmatprep.subr.bf16.mxu0 0
    %2732 = vmatpush1.bf16.msra.mxu0 %v2659
    %2733 = vmatprep.subr.bf16.mxu0 0
    %2734 = vmatpush1.bf16.msra.mxu0 %v2660
    %2735 = vmatprep.subr.bf16.mxu0 0
    %2736 = vmatpush1.bf16.msra.mxu0 %v2661
    %2737 = vmatprep.subr.bf16.mxu0 0
    %2738 = vmatpush1.bf16.msra.mxu0 %v2662
    %2739 = vmatprep.subr.bf16.mxu0 0
    %2740 = vmatpush1.bf16.msra.mxu0 %v2663
    %2741 = vmatprep.subr.bf16.mxu0 0
    %2742 = vmatpush1.bf16.msra.mxu0 %v2664
    %2743 = vmatprep.subr.bf16.mxu0 0
    %2744 = vmatpush1.bf16.msra.mxu0 %v2665
    %2745 = vmatprep.subr.bf16.mxu0 0
    %2746 = vmatpush1.bf16.msra.mxu0 %v2666
    %2747 = vmatprep.mubr.bf16.mxu0 %v2449
    %2748 = vmatmul.mubr.bf16.gmra.mrb[0].mxu0 %v2448
    %v2749 = vpop.f32.mrb[0].mxu0
    %v2750 = vadd.f32 %v2521, %v2749
    %v2751 = vpop.f32.mrb[0].mxu0
    %v2752 = vpop.f32.mrb[0].mxu0
    %v2753 = vadd.f32 %v2521, %v2752
    %v2754 = vpop.f32.mrb[0].mxu0
    %2755 = vdwg.mxu0
    %2756 = vmatprep.subr.bf16.mxu0 0
    %2757 = vmatpush1.bf16.msra.mxu0 %v2667
    %2758 = vmatprep.subr.bf16.mxu0 0
    %2759 = vmatpush1.bf16.msra.mxu0 %v2668
    %2760 = vmatprep.subr.bf16.mxu0 0
    %2761 = vmatpush1.bf16.msra.mxu0 %v2669
    %2762 = vmatprep.subr.bf16.mxu0 0
    %2763 = vmatpush1.bf16.msra.mxu0 %v2670
    %2764 = vmatprep.subr.bf16.mxu0 0
    %2765 = vmatpush1.bf16.msra.mxu0 %v2671
    %2766 = vmatprep.subr.bf16.mxu0 0
    %2767 = vmatpush1.bf16.msra.mxu0 %v2672
    %2768 = vmatprep.subr.bf16.mxu0 0
    %2769 = vmatpush1.bf16.msra.mxu0 %v2673
    %2770 = vmatprep.subr.bf16.mxu0 0
    %2771 = vmatpush1.bf16.msra.mxu0 %v2674
    %2772 = vmatprep.subr.bf16.mxu0 0
    %2773 = vmatpush1.bf16.msra.mxu0 %v2675
    %2774 = vmatprep.subr.bf16.mxu0 0
    %2775 = vmatpush1.bf16.msra.mxu0 %v2676
    %2776 = vmatprep.subr.bf16.mxu0 0
    %2777 = vmatpush1.bf16.msra.mxu0 %v2677
    %2778 = vmatprep.subr.bf16.mxu0 0
    %2779 = vmatpush1.bf16.msra.mxu0 %v2678
    %2780 = vmatprep.subr.bf16.mxu0 0
    %2781 = vmatpush1.bf16.msra.mxu0 %v2679
    %2782 = vmatprep.subr.bf16.mxu0 0
    %2783 = vmatpush1.bf16.msra.mxu0 %v2680
    %2784 = vmatprep.subr.bf16.mxu0 0
    %2785 = vmatpush1.bf16.msra.mxu0 %v2681
    %2786 = vmatprep.subr.bf16.mxu0 0
    %2787 = vmatpush1.bf16.msra.mxu0 %v2682
    %2788 = vmatprep.mubr.bf16.mxu0 %v2451
    %2789 = vmatmul.mubr.bf16.gmra.mrb[0].mxu0 %v2450
    %v2790 = vpop.f32.mrb[0].mxu0
    %v2791 = vadd.f32 %v2750, %v2790
    %v2792 = vpop.f32.mrb[0].mxu0
    %v2793 = vpop.f32.mrb[0].mxu0
    %v2794 = vadd.f32 %v2753, %v2793
    %v2795 = vpop.f32.mrb[0].mxu0
    %2796 = vdwg.mxu0
    %2797 = vst [vmem:[%s9] sm:$0xff] %v2791
    %2798 = vst [vmem:[%s9 + $0x8] sm:$0xff] %v2794
    // Predicated region
    $region54: #{_object_encoder_call.1} parent=1 // pred_check
      _
    $region55: #{_object_encoder_call.1} parent=1 // pred_check_branch
      %2800 = sbr.rel (0) target = $region57
    $region56: #{_object_encoder_call.1} parent=1 // pred_region
      _
    $region57: #{_object_encoder_call.1} parent=1 // pred_fallthru
      _
    // Predicated region
    $region58: #{_object_encoder_call.1} parent=1 // pred_check
      _
    $region59: #{_object_encoder_call.1} parent=1 // pred_check_branch
      %2802 = sbr.rel (0) target = $region61
    $region60: #{_object_encoder_call.1} parent=1 // pred_region
      _
    $region61: #{_object_encoder_call.1} parent=1 // pred_fallthru
      _
    %2803 = vsyncpa [#allocation3], 1
    %2804 = vsyncpa [#allocation5], 1
    %2805 = vsyncpa [#allocation8], 1

</llo_original>
